<compile_context>
chip_gen: v6e
topology: v6e:2x2x1
jax: 0.10.0
libtpu: 0.0.40
codegen_flags: <defaults>
</compile_context>

<pallas_src>
import functools

import jax
import jax.numpy as jnp
from jax.experimental import pallas as pl
from jax.experimental.pallas import tpu as pltpu

_LANE = 128
_SUBLANE = 8

_SQRT_2_OVER_PI = 0.7978845608028654          # sqrt(2/pi)
_GELU_CUBIC = 0.035677408136300125            # 0.044715 * sqrt(2/pi)


def _round_up(n, m):
    return ((n + m - 1) // m) * m


def _gelu_tanh(x):
    # GELU (tanh approximation) with the cubic constant pre-folded:
    #   sqrt(2/pi) * (x + 0.044715 x^3) == x * (sqrt(2/pi) + 0.0356774 x^2)
    inner = x * (_SQRT_2_OVER_PI + _GELU_CUBIC * (x * x))
    return 0.5 * x * (1.0 + jnp.tanh(inner))


def _dnn_kernel(num_layers, residual_flags, *refs):
    # refs = (x_ref, w1, b1, w2, b2, ..., wN, bN, out_ref)
    x_ref = refs[0]
    out_ref = refs[-1]
    param_refs = refs[1:-1]

    x = x_ref[...].astype(jnp.float32)
    for i in range(num_layers):
        w = param_refs[2 * i][...]                  # bf16 (Ip_i, Op_i), lane-dense
        b = param_refs[2 * i + 1][...]              # f32  (1, Op_i) -> broadcasts
        y = jnp.dot(x.astype(jnp.bfloat16), w,
                    preferred_element_type=jnp.float32) + b
        y = _gelu_tanh(y)                           # elementwise in f32
        x = x + y if residual_flags[i] else y       # static per-layer decision
    out_ref[...] = x.astype(out_ref.dtype)


def deep_neural_network_forward(x, weights, biases, use_shortcut, *,
                                block_batch=512):
    """x: (B, in_dim); weights[i]: (in_i, out_i); biases[i]: (out_i,)."""
    num_layers = len(weights)
    B, in_dim = x.shape
    out_dim = weights[-1].shape[1]
    out_dtype = x.dtype

    # --- residual decision from TRUE (unpadded) shapes, like the module -----
    residual_flags = []
    cur_dim = in_dim
    for w in weights:
        od = w.shape[1]
        residual_flags.append(bool(use_shortcut and cur_dim == od))
        cur_dim = od
    residual_flags = tuple(residual_flags)

    # Layer chaining required by the module (Linear input must match activation).
    assert weights[0].shape[0] == in_dim
    for i in range(num_layers - 1):
        assert weights[i].shape[1] == weights[i + 1].shape[0], (
            "layer output dim must match the next layer's input dim")

    # --- per-layer lane-dense padding ----------------------------------------
    Ip = [_round_up(w.shape[0], _LANE) for w in weights]
    Op = [_round_up(w.shape[1], _LANE) for w in weights]
    Ip0, OpN = Ip[0], Op[-1]

    # --- batch tiling ---------------------------------------------------------
    itemsize = jnp.dtype(x.dtype).itemsize
    min_tb = _SUBLANE if itemsize >= 4 else 2 * _SUBLANE   # bf16/fp8 need >=16 sublanes
    block_batch = max(min_tb, _round_up(block_batch, min_tb))
    B_pad = _round_up(B, min_tb)
    if B_pad > block_batch:
        TB = block_batch
        B_pad = _round_up(B_pad, TB)
    elif B_pad >= 2 * _LANE:
        # Split mid-size batches into >=2 tiles so the "parallel" grid axis
        # can occupy both TensorCores on v7x.
        TB = _round_up((B_pad + 1) // 2, min_tb)
        B_pad = _round_up(B_pad, TB)
    else:
        TB = B_pad
    grid = (B_pad // TB,)

    # --- build padded operands (zero pad keeps the math exact: GELU(0)=0) -----
    if B_pad == B and Ip0 == in_dim:
        x_pad = x                                    # no HBM round trip needed
    else:
        x_pad = jnp.zeros((B_pad, Ip0), dtype=x.dtype).at[:B, :in_dim].set(x)

    operands = [x_pad]
    for i, (w, b) in enumerate(zip(weights, biases)):
        ind, od = w.shape
        w_pad = (jnp.zeros((Ip[i], Op[i]), dtype=jnp.bfloat16)
                 .at[:ind, :od].set(w.astype(jnp.bfloat16)))
        b_pad = (jnp.zeros((1, Op[i]), dtype=jnp.float32)
                 .at[0, :od].set(b.astype(jnp.float32)))
        operands += [w_pad, b_pad]

    # --- VMEM budget (params resident + double-buffered x/out + f32 working) --
    param_bytes = sum(Ip[i] * Op[i] * 2 + Op[i] * 4 for i in range(num_layers))
    act_bytes = 2 * TB * Ip0 * itemsize + 2 * TB * OpN * jnp.dtype(out_dtype).itemsize
    work_bytes = 4 * TB * max(Op) * 4               # f32 intermediates inside the body
    vmem_limit = int(min(64 << 20,
                         max(16 << 20,
                             2 * param_bytes + act_bytes + work_bytes + (2 << 20))))

    compiler_params = pltpu.CompilerParams(
        dimension_semantics=("parallel",),          # batch tiles -> both TCs on v7x
        vmem_limit_bytes=vmem_limit,
    )

    kernel = functools.partial(_dnn_kernel, num_layers, residual_flags)
    out_shape = jax.ShapeDtypeStruct((B_pad, OpN), out_dtype)

    def _run(single_buffer_params):
        pm = pl.Buffered(1) if single_buffer_params else None
        in_specs = [pl.BlockSpec((TB, Ip0), lambda i: (i, 0))]
        for li in range(num_layers):
            in_specs.append(pl.BlockSpec((Ip[li], Op[li]), lambda i: (0, 0),
                                         pipeline_mode=pm))     # weight, resident
            in_specs.append(pl.BlockSpec((1, Op[li]), lambda i: (0, 0),
                                         pipeline_mode=pm))     # bias, resident
        out_spec = pl.BlockSpec((TB, OpN), lambda i: (i, 0))
        return pl.pallas_call(
            kernel,
            out_shape=out_shape,
            grid=grid,
            in_specs=in_specs,
            out_specs=out_spec,
            compiler_params=compiler_params,
        )(*operands)

    try:
        # Single-buffer the never-changing params (their index_map is constant).
        out_pad = _run(True)
    except Exception:
        # Fallback: default double-buffering if this backend rejects Buffered(1).
        out_pad = _run(False)

    return out_pad[:B, :out_dim]


def _reference_forward(x, weights, biases, use_shortcut):
    """Pure-JAX reference with the same bf16-input / f32-accumulate matmuls."""
    cur = x.astype(jnp.float32)
    for w, b in zip(weights, biases):
        y = jnp.dot(cur.astype(jnp.bfloat16), w.astype(jnp.bfloat16),
                    preferred_element_type=jnp.float32) + b.astype(jnp.float32)
        # Original (unfolded) tanh-GELU, as in the PyTorch module.
        y = 0.5 * y * (1.0 + jnp.tanh(jnp.sqrt(2.0 / jnp.pi)
                                      * (y + 0.044715 * y ** 3)))
        cur = cur + y if (use_shortcut and cur.shape == y.shape) else y
    return cur


if __name__ == "__main__":
    # Small shapes consistent with the module: 5 layers, hidden=32, last out=16.
    layer_sizes = [32, 32, 32, 32, 32, 16]
    use_shortcut = True
    batch = 8

    key = jax.random.PRNGKey(0)
    keys = jax.random.split(key, 1 + 2 * 5)

    x = jax.random.normal(keys[0], (batch, layer_sizes[0]), dtype=jnp.float32)

    weights = []
    biases = []
    for i in range(5):
        in_dim = layer_sizes[0]            # every layer's input dim (per module)
        out_dim = layer_sizes[i + 1]
        w = 0.02 * jax.random.normal(keys[1 + 2 * i], (in_dim, out_dim),
                                     dtype=jnp.float32)
        b = 0.02 * jax.random.normal(keys[2 + 2 * i], (out_dim,),
                                     dtype=jnp.float32)
        weights.append(w)
        biases.append(b)

    out = deep_neural_network_forward(x, weights, biases, use_shortcut)
    out = jax.block_until_ready(out)

    ref = _reference_forward(x, weights, biases, use_shortcut)
    ref = jax.block_until_ready(ref)

    assert out.shape == (batch, layer_sizes[-1]), f"bad shape {out.shape}"
    assert jnp.allclose(out, ref, atol=1e-4, rtol=1e-4), "mismatch vs reference"

    print("KERNEL_OK")
</pallas_src>

<mosaic_0001>
module attributes {stable_mosaic.version = 11 : i64} {
  func.func @_dnn_kernel(%arg0: i32, %arg1: memref<8x128xf32, #tpu.memory_space<vmem>>, %arg2: memref<128x128xbf16, #tpu.memory_space<vmem>>, %arg3: memref<1x128xf32, #tpu.memory_space<vmem>>, %arg4: memref<128x128xbf16, #tpu.memory_space<vmem>>, %arg5: memref<1x128xf32, #tpu.memory_space<vmem>>, %arg6: memref<128x128xbf16, #tpu.memory_space<vmem>>, %arg7: memref<1x128xf32, #tpu.memory_space<vmem>>, %arg8: memref<128x128xbf16, #tpu.memory_space<vmem>>, %arg9: memref<1x128xf32, #tpu.memory_space<vmem>>, %arg10: memref<128x128xbf16, #tpu.memory_space<vmem>>, %arg11: memref<1x128xf32, #tpu.memory_space<vmem>>, %arg12: memref<8x128xf32, #tpu.memory_space<vmem>>) attributes {dimension_semantics = [#tpu.dimension_semantics<parallel>], iteration_bounds = array<i64: 1>, scalar_prefetch = 0 : i64, scratch_operands = 0 : i64, tpu.core_type = #tpu.core_type<tc>, window_params = [{transform_indices = @transform_0, window_bounds = array<i64: 8, 128>}, {pipeline_mode = #tpu.pipeline_mode<synchronous>, transform_indices = @transform_1, window_bounds = array<i64: 128, 128>}, {pipeline_mode = #tpu.pipeline_mode<synchronous>, transform_indices = @transform_2, window_bounds = array<i64: 1, 128>}, {pipeline_mode = #tpu.pipeline_mode<synchronous>, transform_indices = @transform_3, window_bounds = array<i64: 128, 128>}, {pipeline_mode = #tpu.pipeline_mode<synchronous>, transform_indices = @transform_4, window_bounds = array<i64: 1, 128>}, {pipeline_mode = #tpu.pipeline_mode<synchronous>, transform_indices = @transform_5, window_bounds = array<i64: 128, 128>}, {pipeline_mode = #tpu.pipeline_mode<synchronous>, transform_indices = @transform_6, window_bounds = array<i64: 1, 128>}, {pipeline_mode = #tpu.pipeline_mode<synchronous>, transform_indices = @transform_7, window_bounds = array<i64: 128, 128>}, {pipeline_mode = #tpu.pipeline_mode<synchronous>, transform_indices = @transform_8, window_bounds = array<i64: 1, 128>}, {pipeline_mode = #tpu.pipeline_mode<synchronous>, transform_indices = @transform_9, window_bounds = array<i64: 128, 128>}, {pipeline_mode = #tpu.pipeline_mode<synchronous>, transform_indices = @transform_10, window_bounds = array<i64: 1, 128>}, {transform_indices = @transform_11, window_bounds = array<i64: 8, 128>}]} {
    %c0 = arith.constant 0 : index
    %c0_0 = arith.constant 0 : index
    %0 = vector.load %arg1[%c0, %c0_0] : memref<8x128xf32, #tpu.memory_space<vmem>>, vector<8x128xf32>
    %c0_1 = arith.constant 0 : index
    %c0_2 = arith.constant 0 : index
    %1 = vector.load %arg2[%c0_1, %c0_2] : memref<128x128xbf16, #tpu.memory_space<vmem>>, vector<128x128xbf16>
    %c0_3 = arith.constant 0 : index
    %c0_4 = arith.constant 0 : index
    %2 = vector.load %arg3[%c0_3, %c0_4] : memref<1x128xf32, #tpu.memory_space<vmem>>, vector<1x128xf32>
    %3 = arith.truncf %0 : vector<8x128xf32> to vector<8x128xbf16>
    %cst = arith.constant dense<0.000000e+00> : vector<8x128xf32>
    %4 = tpu.matmul %3, %1, %cst {dimension_numbers = #tpu.dot_dimension_numbers<[1], [0], [0], [1], [0, 0, 1, 1], [], []>} : vector<8x128xbf16>, vector<128x128xbf16>, vector<8x128xf32> -> vector<8x128xf32>
    %5 = vector.broadcast %2 : vector<1x128xf32> to vector<8x128xf32>
    %6 = arith.addf %4, %5 : vector<8x128xf32>
    %7 = arith.mulf %6, %6 : vector<8x128xf32>
    %cst_5 = arith.constant 0.0356774069 : f32
    %8 = vector.broadcast %cst_5 : f32 to vector<8x128xf32>
    %9 = arith.mulf %8, %7 : vector<8x128xf32>
    %cst_6 = arith.constant 0.797884583 : f32
    %10 = vector.broadcast %cst_6 : f32 to vector<8x128xf32>
    %11 = arith.addf %10, %9 : vector<8x128xf32>
    %12 = arith.mulf %6, %11 : vector<8x128xf32>
    %cst_7 = arith.constant 5.000000e-01 : f32
    %13 = vector.broadcast %cst_7 : f32 to vector<8x128xf32>
    %14 = arith.mulf %13, %6 : vector<8x128xf32>
    %15 = math.tanh %12 : vector<8x128xf32>
    %cst_8 = arith.constant 1.000000e+00 : f32
    %16 = vector.broadcast %cst_8 : f32 to vector<8x128xf32>
    %17 = arith.addf %16, %15 : vector<8x128xf32>
    %18 = arith.mulf %14, %17 : vector<8x128xf32>
    %19 = arith.addf %0, %18 : vector<8x128xf32>
    %c0_9 = arith.constant 0 : index
    %c0_10 = arith.constant 0 : index
    %20 = vector.load %arg4[%c0_9, %c0_10] : memref<128x128xbf16, #tpu.memory_space<vmem>>, vector<128x128xbf16>
    %c0_11 = arith.constant 0 : index
    %c0_12 = arith.constant 0 : index
    %21 = vector.load %arg5[%c0_11, %c0_12] : memref<1x128xf32, #tpu.memory_space<vmem>>, vector<1x128xf32>
    %22 = arith.truncf %19 : vector<8x128xf32> to vector<8x128xbf16>
    %cst_13 = arith.constant dense<0.000000e+00> : vector<8x128xf32>
    %23 = tpu.matmul %22, %20, %cst_13 {dimension_numbers = #tpu.dot_dimension_numbers<[1], [0], [0], [1], [0, 0, 1, 1], [], []>} : vector<8x128xbf16>, vector<128x128xbf16>, vector<8x128xf32> -> vector<8x128xf32>
    %24 = vector.broadcast %21 : vector<1x128xf32> to vector<8x128xf32>
    %25 = arith.addf %23, %24 : vector<8x128xf32>
    %26 = arith.mulf %25, %25 : vector<8x128xf32>
    %cst_14 = arith.constant 0.0356774069 : f32
    %27 = vector.broadcast %cst_14 : f32 to vector<8x128xf32>
    %28 = arith.mulf %27, %26 : vector<8x128xf32>
    %cst_15 = arith.constant 0.797884583 : f32
    %29 = vector.broadcast %cst_15 : f32 to vector<8x128xf32>
    %30 = arith.addf %29, %28 : vector<8x128xf32>
    %31 = arith.mulf %25, %30 : vector<8x128xf32>
    %cst_16 = arith.constant 5.000000e-01 : f32
    %32 = vector.broadcast %cst_16 : f32 to vector<8x128xf32>
    %33 = arith.mulf %32, %25 : vector<8x128xf32>
    %34 = math.tanh %31 : vector<8x128xf32>
    %cst_17 = arith.constant 1.000000e+00 : f32
    %35 = vector.broadcast %cst_17 : f32 to vector<8x128xf32>
    %36 = arith.addf %35, %34 : vector<8x128xf32>
    %37 = arith.mulf %33, %36 : vector<8x128xf32>
    %38 = arith.addf %19, %37 : vector<8x128xf32>
    %c0_18 = arith.constant 0 : index
    %c0_19 = arith.constant 0 : index
    %39 = vector.load %arg6[%c0_18, %c0_19] : memref<128x128xbf16, #tpu.memory_space<vmem>>, vector<128x128xbf16>
    %c0_20 = arith.constant 0 : index
    %c0_21 = arith.constant 0 : index
    %40 = vector.load %arg7[%c0_20, %c0_21] : memref<1x128xf32, #tpu.memory_space<vmem>>, vector<1x128xf32>
    %41 = arith.truncf %38 : vector<8x128xf32> to vector<8x128xbf16>
    %cst_22 = arith.constant dense<0.000000e+00> : vector<8x128xf32>
    %42 = tpu.matmul %41, %39, %cst_22 {dimension_numbers = #tpu.dot_dimension_numbers<[1], [0], [0], [1], [0, 0, 1, 1], [], []>} : vector<8x128xbf16>, vector<128x128xbf16>, vector<8x128xf32> -> vector<8x128xf32>
    %43 = vector.broadcast %40 : vector<1x128xf32> to vector<8x128xf32>
    %44 = arith.addf %42, %43 : vector<8x128xf32>
    %45 = arith.mulf %44, %44 : vector<8x128xf32>
    %cst_23 = arith.constant 0.0356774069 : f32
    %46 = vector.broadcast %cst_23 : f32 to vector<8x128xf32>
    %47 = arith.mulf %46, %45 : vector<8x128xf32>
    %cst_24 = arith.constant 0.797884583 : f32
    %48 = vector.broadcast %cst_24 : f32 to vector<8x128xf32>
    %49 = arith.addf %48, %47 : vector<8x128xf32>
    %50 = arith.mulf %44, %49 : vector<8x128xf32>
    %cst_25 = arith.constant 5.000000e-01 : f32
    %51 = vector.broadcast %cst_25 : f32 to vector<8x128xf32>
    %52 = arith.mulf %51, %44 : vector<8x128xf32>
    %53 = math.tanh %50 : vector<8x128xf32>
    %cst_26 = arith.constant 1.000000e+00 : f32
    %54 = vector.broadcast %cst_26 : f32 to vector<8x128xf32>
    %55 = arith.addf %54, %53 : vector<8x128xf32>
    %56 = arith.mulf %52, %55 : vector<8x128xf32>
    %57 = arith.addf %38, %56 : vector<8x128xf32>
    %c0_27 = arith.constant 0 : index
    %c0_28 = arith.constant 0 : index
    %58 = vector.load %arg8[%c0_27, %c0_28] : memref<128x128xbf16, #tpu.memory_space<vmem>>, vector<128x128xbf16>
    %c0_29 = arith.constant 0 : index
    %c0_30 = arith.constant 0 : index
    %59 = vector.load %arg9[%c0_29, %c0_30] : memref<1x128xf32, #tpu.memory_space<vmem>>, vector<1x128xf32>
    %60 = arith.truncf %57 : vector<8x128xf32> to vector<8x128xbf16>
    %cst_31 = arith.constant dense<0.000000e+00> : vector<8x128xf32>
    %61 = tpu.matmul %60, %58, %cst_31 {dimension_numbers = #tpu.dot_dimension_numbers<[1], [0], [0], [1], [0, 0, 1, 1], [], []>} : vector<8x128xbf16>, vector<128x128xbf16>, vector<8x128xf32> -> vector<8x128xf32>
    %62 = vector.broadcast %59 : vector<1x128xf32> to vector<8x128xf32>
    %63 = arith.addf %61, %62 : vector<8x128xf32>
    %64 = arith.mulf %63, %63 : vector<8x128xf32>
    %cst_32 = arith.constant 0.0356774069 : f32
    %65 = vector.broadcast %cst_32 : f32 to vector<8x128xf32>
    %66 = arith.mulf %65, %64 : vector<8x128xf32>
    %cst_33 = arith.constant 0.797884583 : f32
    %67 = vector.broadcast %cst_33 : f32 to vector<8x128xf32>
    %68 = arith.addf %67, %66 : vector<8x128xf32>
    %69 = arith.mulf %63, %68 : vector<8x128xf32>
    %cst_34 = arith.constant 5.000000e-01 : f32
    %70 = vector.broadcast %cst_34 : f32 to vector<8x128xf32>
    %71 = arith.mulf %70, %63 : vector<8x128xf32>
    %72 = math.tanh %69 : vector<8x128xf32>
    %cst_35 = arith.constant 1.000000e+00 : f32
    %73 = vector.broadcast %cst_35 : f32 to vector<8x128xf32>
    %74 = arith.addf %73, %72 : vector<8x128xf32>
    %75 = arith.mulf %71, %74 : vector<8x128xf32>
    %76 = arith.addf %57, %75 : vector<8x128xf32>
    %c0_36 = arith.constant 0 : index
    %c0_37 = arith.constant 0 : index
    %77 = vector.load %arg10[%c0_36, %c0_37] : memref<128x128xbf16, #tpu.memory_space<vmem>>, vector<128x128xbf16>
    %c0_38 = arith.constant 0 : index
    %c0_39 = arith.constant 0 : index
    %78 = vector.load %arg11[%c0_38, %c0_39] : memref<1x128xf32, #tpu.memory_space<vmem>>, vector<1x128xf32>
    %79 = arith.truncf %76 : vector<8x128xf32> to vector<8x128xbf16>
    %cst_40 = arith.constant dense<0.000000e+00> : vector<8x128xf32>
    %80 = tpu.matmul %79, %77, %cst_40 {dimension_numbers = #tpu.dot_dimension_numbers<[1], [0], [0], [1], [0, 0, 1, 1], [], []>} : vector<8x128xbf16>, vector<128x128xbf16>, vector<8x128xf32> -> vector<8x128xf32>
    %81 = vector.broadcast %78 : vector<1x128xf32> to vector<8x128xf32>
    %82 = arith.addf %80, %81 : vector<8x128xf32>
    %83 = arith.mulf %82, %82 : vector<8x128xf32>
    %cst_41 = arith.constant 0.0356774069 : f32
    %84 = vector.broadcast %cst_41 : f32 to vector<8x128xf32>
    %85 = arith.mulf %84, %83 : vector<8x128xf32>
    %cst_42 = arith.constant 0.797884583 : f32
    %86 = vector.broadcast %cst_42 : f32 to vector<8x128xf32>
    %87 = arith.addf %86, %85 : vector<8x128xf32>
    %88 = arith.mulf %82, %87 : vector<8x128xf32>
    %cst_43 = arith.constant 5.000000e-01 : f32
    %89 = vector.broadcast %cst_43 : f32 to vector<8x128xf32>
    %90 = arith.mulf %89, %82 : vector<8x128xf32>
    %91 = math.tanh %88 : vector<8x128xf32>
    %cst_44 = arith.constant 1.000000e+00 : f32
    %92 = vector.broadcast %cst_44 : f32 to vector<8x128xf32>
    %93 = arith.addf %92, %91 : vector<8x128xf32>
    %94 = arith.mulf %90, %93 : vector<8x128xf32>
    %c0_45 = arith.constant 0 : index
    %c0_46 = arith.constant 0 : index
    %95 = vector.load %arg12[%c0_45, %c0_46] : memref<8x128xf32, #tpu.memory_space<vmem>>, vector<8x128xf32>
    tpu.vector_store %arg12[%c0_45, %c0_46], %94 {strides = array<i32>} : memref<8x128xf32, #tpu.memory_space<vmem>>, vector<8x128xf32>,
    return
  }
  func.func @transform_0(%arg0: i32) -> (i32, i32) {
    %c0_i32 = arith.constant 0 : i32
    %c0_i32_0 = arith.constant 0 : i32
    return %arg0, %c0_i32 : i32, i32
  }
  func.func @transform_1(%arg0: i32) -> (i32, i32) {
    %c0_i32 = arith.constant 0 : i32
    %c0_i32_0 = arith.constant 0 : i32
    %c0_i32_1 = arith.constant 0 : i32
    return %c0_i32, %c0_i32_0 : i32, i32
  }
  func.func @transform_2(%arg0: i32) -> (i32, i32) {
    %c0_i32 = arith.constant 0 : i32
    %c0_i32_0 = arith.constant 0 : i32
    %c0_i32_1 = arith.constant 0 : i32
    return %c0_i32, %c0_i32_0 : i32, i32
  }
  func.func @transform_3(%arg0: i32) -> (i32, i32) {
    %c0_i32 = arith.constant 0 : i32
    %c0_i32_0 = arith.constant 0 : i32
    %c0_i32_1 = arith.constant 0 : i32
    return %c0_i32, %c0_i32_0 : i32, i32
  }
  func.func @transform_4(%arg0: i32) -> (i32, i32) {
    %c0_i32 = arith.constant 0 : i32
    %c0_i32_0 = arith.constant 0 : i32
    %c0_i32_1 = arith.constant 0 : i32
    return %c0_i32, %c0_i32_0 : i32, i32
  }
  func.func @transform_5(%arg0: i32) -> (i32, i32) {
    %c0_i32 = arith.constant 0 : i32
    %c0_i32_0 = arith.constant 0 : i32
    %c0_i32_1 = arith.constant 0 : i32
    return %c0_i32, %c0_i32_0 : i32, i32
  }
  func.func @transform_6(%arg0: i32) -> (i32, i32) {
    %c0_i32 = arith.constant 0 : i32
    %c0_i32_0 = arith.constant 0 : i32
    %c0_i32_1 = arith.constant 0 : i32
    return %c0_i32, %c0_i32_0 : i32, i32
  }
  func.func @transform_7(%arg0: i32) -> (i32, i32) {
    %c0_i32 = arith.constant 0 : i32
    %c0_i32_0 = arith.constant 0 : i32
    %c0_i32_1 = arith.constant 0 : i32
    return %c0_i32, %c0_i32_0 : i32, i32
  }
  func.func @transform_8(%arg0: i32) -> (i32, i32) {
    %c0_i32 = arith.constant 0 : i32
    %c0_i32_0 = arith.constant 0 : i32
    %c0_i32_1 = arith.constant 0 : i32
    return %c0_i32, %c0_i32_0 : i32, i32
  }
  func.func @transform_9(%arg0: i32) -> (i32, i32) {
    %c0_i32 = arith.constant 0 : i32
    %c0_i32_0 = arith.constant 0 : i32
    %c0_i32_1 = arith.constant 0 : i32
    return %c0_i32, %c0_i32_0 : i32, i32
  }
  func.func @transform_10(%arg0: i32) -> (i32, i32) {
    %c0_i32 = arith.constant 0 : i32
    %c0_i32_0 = arith.constant 0 : i32
    %c0_i32_1 = arith.constant 0 : i32
    return %c0_i32, %c0_i32_0 : i32, i32
  }
  func.func @transform_11(%arg0: i32) -> (i32, i32) {
    %c0_i32 = arith.constant 0 : i32
    %c0_i32_0 = arith.constant 0 : i32
    return %arg0, %c0_i32 : i32, i32
  }
}

module attributes {stable_mosaic.version = 11 : i64} {
  func.func @_dnn_kernel(%arg0: i32, %arg1: memref<8x128xf32, #tpu.memory_space<vmem>>, %arg2: memref<128x128xbf16, #tpu.memory_space<vmem>>, %arg3: memref<1x128xf32, #tpu.memory_space<vmem>>, %arg4: memref<128x128xbf16, #tpu.memory_space<vmem>>, %arg5: memref<1x128xf32, #tpu.memory_space<vmem>>, %arg6: memref<128x128xbf16, #tpu.memory_space<vmem>>, %arg7: memref<1x128xf32, #tpu.memory_space<vmem>>, %arg8: memref<128x128xbf16, #tpu.memory_space<vmem>>, %arg9: memref<1x128xf32, #tpu.memory_space<vmem>>, %arg10: memref<128x128xbf16, #tpu.memory_space<vmem>>, %arg11: memref<1x128xf32, #tpu.memory_space<vmem>>, %arg12: memref<8x128xf32, #tpu.memory_space<vmem>>) attributes {dimension_semantics = [#tpu.dimension_semantics<parallel>], iteration_bounds = array<i64: 1>, scalar_prefetch = 0 : i64, scratch_operands = 0 : i64, tpu.core_type = #tpu.core_type<tc>, window_params = [{transform_indices = @transform_0, window_bounds = array<i64: 8, 128>}, {pipeline_mode = #tpu.pipeline_mode<synchronous>, transform_indices = @transform_1, window_bounds = array<i64: 128, 128>}, {pipeline_mode = #tpu.pipeline_mode<synchronous>, transform_indices = @transform_2, window_bounds = array<i64: 1, 128>}, {pipeline_mode = #tpu.pipeline_mode<synchronous>, transform_indices = @transform_3, window_bounds = array<i64: 128, 128>}, {pipeline_mode = #tpu.pipeline_mode<synchronous>, transform_indices = @transform_4, window_bounds = array<i64: 1, 128>}, {pipeline_mode = #tpu.pipeline_mode<synchronous>, transform_indices = @transform_5, window_bounds = array<i64: 128, 128>}, {pipeline_mode = #tpu.pipeline_mode<synchronous>, transform_indices = @transform_6, window_bounds = array<i64: 1, 128>}, {pipeline_mode = #tpu.pipeline_mode<synchronous>, transform_indices = @transform_7, window_bounds = array<i64: 128, 128>}, {pipeline_mode = #tpu.pipeline_mode<synchronous>, transform_indices = @transform_8, window_bounds = array<i64: 1, 128>}, {pipeline_mode = #tpu.pipeline_mode<synchronous>, transform_indices = @transform_9, window_bounds = array<i64: 128, 128>}, {pipeline_mode = #tpu.pipeline_mode<synchronous>, transform_indices = @transform_10, window_bounds = array<i64: 1, 128>}, {transform_indices = @transform_11, window_bounds = array<i64: 8, 128>}]} {
    %c0 = arith.constant 0 : index
    %c0_0 = arith.constant 0 : index
    %0 = vector.load %arg1[%c0, %c0_0] : memref<8x128xf32, #tpu.memory_space<vmem>>, vector<8x128xf32>
    %c0_1 = arith.constant 0 : index
    %c0_2 = arith.constant 0 : index
    %1 = vector.load %arg2[%c0_1, %c0_2] : memref<128x128xbf16, #tpu.memory_space<vmem>>, vector<128x128xbf16>
    %c0_3 = arith.constant 0 : index
    %c0_4 = arith.constant 0 : index
    %2 = vector.load %arg3[%c0_3, %c0_4] : memref<1x128xf32, #tpu.memory_space<vmem>>, vector<1x128xf32>
    %3 = arith.truncf %0 : vector<8x128xf32> to vector<8x128xbf16>
    %cst = arith.constant dense<0.000000e+00> : vector<8x128xf32>
    %4 = tpu.matmul %3, %1, %cst {dimension_numbers = #tpu.dot_dimension_numbers<[1], [0], [0], [1], [0, 0, 1, 1], [], []>} : vector<8x128xbf16>, vector<128x128xbf16>, vector<8x128xf32> -> vector<8x128xf32>
    %5 = vector.broadcast %2 : vector<1x128xf32> to vector<8x128xf32>
    %6 = arith.addf %4, %5 : vector<8x128xf32>
    %7 = arith.mulf %6, %6 : vector<8x128xf32>
    %cst_5 = arith.constant 0.0356774069 : f32
    %8 = vector.broadcast %cst_5 : f32 to vector<8x128xf32>
    %9 = arith.mulf %8, %7 : vector<8x128xf32>
    %cst_6 = arith.constant 0.797884583 : f32
    %10 = vector.broadcast %cst_6 : f32 to vector<8x128xf32>
    %11 = arith.addf %10, %9 : vector<8x128xf32>
    %12 = arith.mulf %6, %11 : vector<8x128xf32>
    %cst_7 = arith.constant 5.000000e-01 : f32
    %13 = vector.broadcast %cst_7 : f32 to vector<8x128xf32>
    %14 = arith.mulf %13, %6 : vector<8x128xf32>
    %15 = math.tanh %12 : vector<8x128xf32>
    %cst_8 = arith.constant 1.000000e+00 : f32
    %16 = vector.broadcast %cst_8 : f32 to vector<8x128xf32>
    %17 = arith.addf %16, %15 : vector<8x128xf32>
    %18 = arith.mulf %14, %17 : vector<8x128xf32>
    %19 = arith.addf %0, %18 : vector<8x128xf32>
    %c0_9 = arith.constant 0 : index
    %c0_10 = arith.constant 0 : index
    %20 = vector.load %arg4[%c0_9, %c0_10] : memref<128x128xbf16, #tpu.memory_space<vmem>>, vector<128x128xbf16>
    %c0_11 = arith.constant 0 : index
    %c0_12 = arith.constant 0 : index
    %21 = vector.load %arg5[%c0_11, %c0_12] : memref<1x128xf32, #tpu.memory_space<vmem>>, vector<1x128xf32>
    %22 = arith.truncf %19 : vector<8x128xf32> to vector<8x128xbf16>
    %cst_13 = arith.constant dense<0.000000e+00> : vector<8x128xf32>
    %23 = tpu.matmul %22, %20, %cst_13 {dimension_numbers = #tpu.dot_dimension_numbers<[1], [0], [0], [1], [0, 0, 1, 1], [], []>} : vector<8x128xbf16>, vector<128x128xbf16>, vector<8x128xf32> -> vector<8x128xf32>
    %24 = vector.broadcast %21 : vector<1x128xf32> to vector<8x128xf32>
    %25 = arith.addf %23, %24 : vector<8x128xf32>
    %26 = arith.mulf %25, %25 : vector<8x128xf32>
    %cst_14 = arith.constant 0.0356774069 : f32
    %27 = vector.broadcast %cst_14 : f32 to vector<8x128xf32>
    %28 = arith.mulf %27, %26 : vector<8x128xf32>
    %cst_15 = arith.constant 0.797884583 : f32
    %29 = vector.broadcast %cst_15 : f32 to vector<8x128xf32>
    %30 = arith.addf %29, %28 : vector<8x128xf32>
    %31 = arith.mulf %25, %30 : vector<8x128xf32>
    %cst_16 = arith.constant 5.000000e-01 : f32
    %32 = vector.broadcast %cst_16 : f32 to vector<8x128xf32>
    %33 = arith.mulf %32, %25 : vector<8x128xf32>
    %34 = math.tanh %31 : vector<8x128xf32>
    %cst_17 = arith.constant 1.000000e+00 : f32
    %35 = vector.broadcast %cst_17 : f32 to vector<8x128xf32>
    %36 = arith.addf %35, %34 : vector<8x128xf32>
    %37 = arith.mulf %33, %36 : vector<8x128xf32>
    %38 = arith.addf %19, %37 : vector<8x128xf32>
    %c0_18 = arith.constant 0 : index
    %c0_19 = arith.constant 0 : index
    %39 = vector.load %arg6[%c0_18, %c0_19] : memref<128x128xbf16, #tpu.memory_space<vmem>>, vector<128x128xbf16>
    %c0_20 = arith.constant 0 : index
    %c0_21 = arith.constant 0 : index
    %40 = vector.load %arg7[%c0_20, %c0_21] : memref<1x128xf32, #tpu.memory_space<vmem>>, vector<1x128xf32>
    %41 = arith.truncf %38 : vector<8x128xf32> to vector<8x128xbf16>
    %cst_22 = arith.constant dense<0.000000e+00> : vector<8x128xf32>
    %42 = tpu.matmul %41, %39, %cst_22 {dimension_numbers = #tpu.dot_dimension_numbers<[1], [0], [0], [1], [0, 0, 1, 1], [], []>} : vector<8x128xbf16>, vector<128x128xbf16>, vector<8x128xf32> -> vector<8x128xf32>
    %43 = vector.broadcast %40 : vector<1x128xf32> to vector<8x128xf32>
    %44 = arith.addf %42, %43 : vector<8x128xf32>
    %45 = arith.mulf %44, %44 : vector<8x128xf32>
    %cst_23 = arith.constant 0.0356774069 : f32
    %46 = vector.broadcast %cst_23 : f32 to vector<8x128xf32>
    %47 = arith.mulf %46, %45 : vector<8x128xf32>
    %cst_24 = arith.constant 0.797884583 : f32
    %48 = vector.broadcast %cst_24 : f32 to vector<8x128xf32>
    %49 = arith.addf %48, %47 : vector<8x128xf32>
    %50 = arith.mulf %44, %49 : vector<8x128xf32>
    %cst_25 = arith.constant 5.000000e-01 : f32
    %51 = vector.broadcast %cst_25 : f32 to vector<8x128xf32>
    %52 = arith.mulf %51, %44 : vector<8x128xf32>
    %53 = math.tanh %50 : vector<8x128xf32>
    %cst_26 = arith.constant 1.000000e+00 : f32
    %54 = vector.broadcast %cst_26 : f32 to vector<8x128xf32>
    %55 = arith.addf %54, %53 : vector<8x128xf32>
    %56 = arith.mulf %52, %55 : vector<8x128xf32>
    %57 = arith.addf %38, %56 : vector<8x128xf32>
    %c0_27 = arith.constant 0 : index
    %c0_28 = arith.constant 0 : index
    %58 = vector.load %arg8[%c0_27, %c0_28] : memref<128x128xbf16, #tpu.memory_space<vmem>>, vector<128x128xbf16>
    %c0_29 = arith.constant 0 : index
    %c0_30 = arith.constant 0 : index
    %59 = vector.load %arg9[%c0_29, %c0_30] : memref<1x128xf32, #tpu.memory_space<vmem>>, vector<1x128xf32>
    %60 = arith.truncf %57 : vector<8x128xf32> to vector<8x128xbf16>
    %cst_31 = arith.constant dense<0.000000e+00> : vector<8x128xf32>
    %61 = tpu.matmul %60, %58, %cst_31 {dimension_numbers = #tpu.dot_dimension_numbers<[1], [0], [0], [1], [0, 0, 1, 1], [], []>} : vector<8x128xbf16>, vector<128x128xbf16>, vector<8x128xf32> -> vector<8x128xf32>
    %62 = vector.broadcast %59 : vector<1x128xf32> to vector<8x128xf32>
    %63 = arith.addf %61, %62 : vector<8x128xf32>
    %64 = arith.mulf %63, %63 : vector<8x128xf32>
    %cst_32 = arith.constant 0.0356774069 : f32
    %65 = vector.broadcast %cst_32 : f32 to vector<8x128xf32>
    %66 = arith.mulf %65, %64 : vector<8x128xf32>
    %cst_33 = arith.constant 0.797884583 : f32
    %67 = vector.broadcast %cst_33 : f32 to vector<8x128xf32>
    %68 = arith.addf %67, %66 : vector<8x128xf32>
    %69 = arith.mulf %63, %68 : vector<8x128xf32>
    %cst_34 = arith.constant 5.000000e-01 : f32
    %70 = vector.broadcast %cst_34 : f32 to vector<8x128xf32>
    %71 = arith.mulf %70, %63 : vector<8x128xf32>
    %72 = math.tanh %69 : vector<8x128xf32>
    %cst_35 = arith.constant 1.000000e+00 : f32
    %73 = vector.broadcast %cst_35 : f32 to vector<8x128xf32>
    %74 = arith.addf %73, %72 : vector<8x128xf32>
    %75 = arith.mulf %71, %74 : vector<8x128xf32>
    %76 = arith.addf %57, %75 : vector<8x128xf32>
    %c0_36 = arith.constant 0 : index
    %c0_37 = arith.constant 0 : index
    %77 = vector.load %arg10[%c0_36, %c0_37] : memref<128x128xbf16, #tpu.memory_space<vmem>>, vector<128x128xbf16>
    %c0_38 = arith.constant 0 : index
    %c0_39 = arith.constant 0 : index
    %78 = vector.load %arg11[%c0_38, %c0_39] : memref<1x128xf32, #tpu.memory_space<vmem>>, vector<1x128xf32>
    %79 = arith.truncf %76 : vector<8x128xf32> to vector<8x128xbf16>
    %cst_40 = arith.constant dense<0.000000e+00> : vector<8x128xf32>
    %80 = tpu.matmul %79, %77, %cst_40 {dimension_numbers = #tpu.dot_dimension_numbers<[1], [0], [0], [1], [0, 0, 1, 1], [], []>} : vector<8x128xbf16>, vector<128x128xbf16>, vector<8x128xf32> -> vector<8x128xf32>
    %81 = vector.broadcast %78 : vector<1x128xf32> to vector<8x128xf32>
    %82 = arith.addf %80, %81 : vector<8x128xf32>
    %83 = arith.mulf %82, %82 : vector<8x128xf32>
    %cst_41 = arith.constant 0.0356774069 : f32
    %84 = vector.broadcast %cst_41 : f32 to vector<8x128xf32>
    %85 = arith.mulf %84, %83 : vector<8x128xf32>
    %cst_42 = arith.constant 0.797884583 : f32
    %86 = vector.broadcast %cst_42 : f32 to vector<8x128xf32>
    %87 = arith.addf %86, %85 : vector<8x128xf32>
    %88 = arith.mulf %82, %87 : vector<8x128xf32>
    %cst_43 = arith.constant 5.000000e-01 : f32
    %89 = vector.broadcast %cst_43 : f32 to vector<8x128xf32>
    %90 = arith.mulf %89, %82 : vector<8x128xf32>
    %91 = math.tanh %88 : vector<8x128xf32>
    %cst_44 = arith.constant 1.000000e+00 : f32
    %92 = vector.broadcast %cst_44 : f32 to vector<8x128xf32>
    %93 = arith.addf %92, %91 : vector<8x128xf32>
    %94 = arith.mulf %90, %93 : vector<8x128xf32>
    %c0_45 = arith.constant 0 : index
    %c0_46 = arith.constant 0 : index
    %95 = vector.load %arg12[%c0_45, %c0_46] : memref<8x128xf32, #tpu.memory_space<vmem>>, vector<8x128xf32>
    tpu.vector_store %arg12[%c0_45, %c0_46], %94 {strides = array<i32>} : memref<8x128xf32, #tpu.memory_space<vmem>>, vector<8x128xf32>,
    return
  }
  func.func @transform_0(%arg0: i32) -> (i32, i32) {
    %c0_i32 = arith.constant 0 : i32
    %c0_i32_0 = arith.constant 0 : i32
    return %arg0, %c0_i32 : i32, i32
  }
  func.func @transform_1(%arg0: i32) -> (i32, i32) {
    %c0_i32 = arith.constant 0 : i32
    %c0_i32_0 = arith.constant 0 : i32
    %c0_i32_1 = arith.constant 0 : i32
    return %c0_i32, %c0_i32_0 : i32, i32
  }
  func.func @transform_2(%arg0: i32) -> (i32, i32) {
    %c0_i32 = arith.constant 0 : i32
    %c0_i32_0 = arith.constant 0 : i32
    %c0_i32_1 = arith.constant 0 : i32
    return %c0_i32, %c0_i32_0 : i32, i32
  }
  func.func @transform_3(%arg0: i32) -> (i32, i32) {
    %c0_i32 = arith.constant 0 : i32
    %c0_i32_0 = arith.constant 0 : i32
    %c0_i32_1 = arith.constant 0 : i32
    return %c0_i32, %c0_i32_0 : i32, i32
  }
  func.func @transform_4(%arg0: i32) -> (i32, i32) {
    %c0_i32 = arith.constant 0 : i32
    %c0_i32_0 = arith.constant 0 : i32
    %c0_i32_1 = arith.constant 0 : i32
    return %c0_i32, %c0_i32_0 : i32, i32
  }
  func.func @transform_5(%arg0: i32) -> (i32, i32) {
    %c0_i32 = arith.constant 0 : i32
    %c0_i32_0 = arith.constant 0 : i32
    %c0_i32_1 = arith.constant 0 : i32
    return %c0_i32, %c0_i32_0 : i32, i32
  }
  func.func @transform_6(%arg0: i32) -> (i32, i32) {
    %c0_i32 = arith.constant 0 : i32
    %c0_i32_0 = arith.constant 0 : i32
    %c0_i32_1 = arith.constant 0 : i32
    return %c0_i32, %c0_i32_0 : i32, i32
  }
  func.func @transform_7(%arg0: i32) -> (i32, i32) {
    %c0_i32 = arith.constant 0 : i32
    %c0_i32_0 = arith.constant 0 : i32
    %c0_i32_1 = arith.constant 0 : i32
    return %c0_i32, %c0_i32_0 : i32, i32
  }
  func.func @transform_8(%arg0: i32) -> (i32, i32) {
    %c0_i32 = arith.constant 0 : i32
    %c0_i32_0 = arith.constant 0 : i32
    %c0_i32_1 = arith.constant 0 : i32
    return %c0_i32, %c0_i32_0 : i32, i32
  }
  func.func @transform_9(%arg0: i32) -> (i32, i32) {
    %c0_i32 = arith.constant 0 : i32
    %c0_i32_0 = arith.constant 0 : i32
    %c0_i32_1 = arith.constant 0 : i32
    return %c0_i32, %c0_i32_0 : i32, i32
  }
  func.func @transform_10(%arg0: i32) -> (i32, i32) {
    %c0_i32 = arith.constant 0 : i32
    %c0_i32_0 = arith.constant 0 : i32
    %c0_i32_1 = arith.constant 0 : i32
    return %c0_i32, %c0_i32_0 : i32, i32
  }
  func.func @transform_11(%arg0: i32) -> (i32, i32) {
    %c0_i32 = arith.constant 0 : i32
    %c0_i32_0 = arith.constant 0 : i32
    return %arg0, %c0_i32 : i32, i32
  }
}

</mosaic_0001>

<llo_original>
// kernel: tpu_custom_call.1
$region0: #{tpu_custom_call.1}
  #allocation0 [shape = 'u32[]', space=smem, size = 0x4, offset = 0x4, fixed_abs, tag = 'smem constant byte address 0x4 - core index']
  #allocation1 [shape = 'u32[144,128]{1,0:T(1,128)}', space=vmem, size = 0x12000, scoped, tag = 'internal scratch']
  %s0 = inlined_call_operand.hbm [shape: f32[8,128], index: 0, kind: input, shape index: {}]
  %s1 = inlined_call_operand.hbm [shape: bf16[128,128], index: 1, kind: input, shape index: {}]
  %s2 = inlined_call_operand.vmem [shape: f32[1,128], index: 2, kind: input, shape index: {}]
  %s3 = inlined_call_operand.hbm [shape: bf16[128,128], index: 3, kind: input, shape index: {}]
  %s4 = inlined_call_operand.vmem [shape: f32[1,128], index: 4, kind: input, shape index: {}]
  %s5 = inlined_call_operand.hbm [shape: bf16[128,128], index: 5, kind: input, shape index: {}]
  %s6 = inlined_call_operand.vmem [shape: f32[1,128], index: 6, kind: input, shape index: {}]
  %s7 = inlined_call_operand.hbm [shape: bf16[128,128], index: 7, kind: input, shape index: {}]
  %s8 = inlined_call_operand.vmem [shape: f32[1,128], index: 8, kind: input, shape index: {}]
  %s9 = inlined_call_operand.hbm [shape: bf16[128,128], index: 9, kind: input, shape index: {}]
  %s10 = inlined_call_operand.vmem [shape: f32[1,128], index: 10, kind: input, shape index: {}]
  %s11 = inlined_call_operand.hbm [shape: f32[8,128], index: 11, kind: output, shape index: {}]
  %s12 = sld [smem:[#allocation0]]
  $region78: #{tpu_custom_call.1} parent=0
    _
  %s14 = ssub.s32 1, %s12
  %s15 = scalar_select 0, %s14, %s12
  $region1: #{tpu_custom_call.1} parent=0
    #allocation2 [shape = 'u8[4096]{0}', space=vmem, size = 0x1000, scoped, tag = 'input window, operand 0, single buffered']
    #allocation3 [shape = 's32[1]{0}', space=sflag, size = 0x4, scoped, tag = 'scoped memory for tpu_custom_call.1']
    #allocation4 [shape = 's32[1]{0}', space=sflag, size = 0x4, scoped, tag = 'scoped memory for tpu_custom_call.1']
    #allocation5 [shape = 'u8[32768]{0}', space=vmem, size = 0x8000, scoped, tag = 'input window, operand 1, single buffered']
    #allocation6 [shape = 's32[1]{0}', space=sflag, size = 0x4, scoped, tag = 'scoped memory for tpu_custom_call.1']
    #allocation7 [shape = 'u8[32768]{0}', space=vmem, size = 0x8000, scoped, tag = 'input window, operand 3, single buffered']
    #allocation8 [shape = 'u8[32768]{0}', space=vmem, size = 0x8000, scoped, tag = 'input window, operand 5, single buffered']
    #allocation9 [shape = 's32[1]{0}', space=sflag, size = 0x4, scoped, tag = 'scoped memory for tpu_custom_call.1']
    #allocation10 [shape = 'u8[32768]{0}', space=vmem, size = 0x8000, scoped, tag = 'input window, operand 7, single buffered']
    #allocation11 [shape = 'u8[32768]{0}', space=vmem, size = 0x8000, scoped, tag = 'input window, operand 9, single buffered']
    #allocation12 [shape = 's32[1]{0}', space=sflag, size = 0x4, scoped, tag = 'scoped memory for tpu_custom_call.1']
    #allocation13 [shape = 'u8[4096]{0}', space=vmem, size = 0x1000, scoped, tag = 'output window, operand 0, single buffered']
    %16 = vsyncpa [#allocation3], 0
    %17 = vsyncpa [#allocation6], 0
    %18 = vsyncpa [#allocation9], 0
    %19 = vsyncpa [#allocation12], 0
    %20 = vsyncpa [#allocation4], 0
    // Predicated region
    $region2: #{tpu_custom_call.1} parent=1 // pred_check
      _
    $region3: #{tpu_custom_call.1} parent=1 // pred_check_branch
      %22 = sbr.rel (0) target = $region5
    $region4: #{tpu_custom_call.1} parent=1 // pred_region
      %s24 = ssub.s32 128, 128
      %25 = vsyncadd [#allocation3], %s24
      %s27 = sshll.u32 [#allocation2], 4
      %s28 = int_to_ptr.vmem [resolvable:$true] %s27
      %30 = dma.hbm_to_vmem [thread:$0]  %s0, 128, %s28, [#allocation3]
    $region5: #{tpu_custom_call.1} parent=1 // pred_fallthru
      _
    // Predicated region
    $region6: #{tpu_custom_call.1} parent=1 // pred_check
      _
    $region7: #{tpu_custom_call.1} parent=1 // pred_check_branch
      %32 = sbr.rel (0) target = $region9
    $region8: #{tpu_custom_call.1} parent=1 // pred_region
      %s34 = ssub.s32 1024, 1024
      %35 = vsyncadd [#allocation6], %s34
      %s36 = sshll.u32 [#allocation5], 4
      %s37 = int_to_ptr.vmem [resolvable:$true] %s36
      %42 = dma.hbm_to_vmem [thread:$0]  %s1, 1024, %s37, [#allocation6], 64, 64, 4
    $region9: #{tpu_custom_call.1} parent=1 // pred_fallthru
      _
    // Predicated region
    $region10: #{tpu_custom_call.1} parent=1 // pred_check
      _
    $region11: #{tpu_custom_call.1} parent=1 // pred_check_branch
      %44 = sbr.rel (0) target = $region13
    $region12: #{tpu_custom_call.1} parent=1 // pred_region
      _
    $region13: #{tpu_custom_call.1} parent=1 // pred_fallthru
      _
    // Predicated region
    $region14: #{tpu_custom_call.1} parent=1 // pred_check
      _
    $region15: #{tpu_custom_call.1} parent=1 // pred_check_branch
      %46 = sbr.rel (0) target = $region17
    $region16: #{tpu_custom_call.1} parent=1 // pred_region
      %s48 = ssub.s32 1024, 1024
      %49 = vsyncadd [#allocation6], %s48
      %s50 = sshll.u32 [#allocation7], 4
      %s51 = int_to_ptr.vmem [resolvable:$true] %s50
      %56 = dma.hbm_to_vmem [thread:$0]  %s3, 1024, %s51, [#allocation6], 64, 64, 4
    $region17: #{tpu_custom_call.1} parent=1 // pred_fallthru
      _
    // Predicated region
    $region18: #{tpu_custom_call.1} parent=1 // pred_check
      _
    $region19: #{tpu_custom_call.1} parent=1 // pred_check_branch
      %58 = sbr.rel (0) target = $region21
    $region20: #{tpu_custom_call.1} parent=1 // pred_region
      _
    $region21: #{tpu_custom_call.1} parent=1 // pred_fallthru
      _
    // Predicated region
    $region22: #{tpu_custom_call.1} parent=1 // pred_check
      _
    $region23: #{tpu_custom_call.1} parent=1 // pred_check_branch
      %60 = sbr.rel (0) target = $region25
    $region24: #{tpu_custom_call.1} parent=1 // pred_region
      %s62 = ssub.s32 1024, 1024
      %63 = vsyncadd [#allocation9], %s62
      %s64 = sshll.u32 [#allocation8], 4
      %s65 = int_to_ptr.vmem [resolvable:$true] %s64
      %70 = dma.hbm_to_vmem [thread:$0]  %s5, 1024, %s65, [#allocation9], 64, 64, 4
    $region25: #{tpu_custom_call.1} parent=1 // pred_fallthru
      _
    // Predicated region
    $region26: #{tpu_custom_call.1} parent=1 // pred_check
      _
    $region27: #{tpu_custom_call.1} parent=1 // pred_check_branch
      %72 = sbr.rel (0) target = $region29
    $region28: #{tpu_custom_call.1} parent=1 // pred_region
      _
    $region29: #{tpu_custom_call.1} parent=1 // pred_fallthru
      _
    // Predicated region
    $region30: #{tpu_custom_call.1} parent=1 // pred_check
      _
    $region31: #{tpu_custom_call.1} parent=1 // pred_check_branch
      %74 = sbr.rel (0) target = $region33
    $region32: #{tpu_custom_call.1} parent=1 // pred_region
      %s76 = ssub.s32 1024, 1024
      %77 = vsyncadd [#allocation9], %s76
      %s78 = sshll.u32 [#allocation10], 4
      %s79 = int_to_ptr.vmem [resolvable:$true] %s78
      %84 = dma.hbm_to_vmem [thread:$0]  %s7, 1024, %s79, [#allocation9], 64, 64, 4
    $region33: #{tpu_custom_call.1} parent=1 // pred_fallthru
      _
    // Predicated region
    $region34: #{tpu_custom_call.1} parent=1 // pred_check
      _
    $region35: #{tpu_custom_call.1} parent=1 // pred_check_branch
      %86 = sbr.rel (0) target = $region37
    $region36: #{tpu_custom_call.1} parent=1 // pred_region
      _
    $region37: #{tpu_custom_call.1} parent=1 // pred_fallthru
      _
    // Predicated region
    $region38: #{tpu_custom_call.1} parent=1 // pred_check
      _
    $region39: #{tpu_custom_call.1} parent=1 // pred_check_branch
      %88 = sbr.rel (0) target = $region41
    $region40: #{tpu_custom_call.1} parent=1 // pred_region
      %s90 = ssub.s32 1024, 1024
      %91 = vsyncadd [#allocation12], %s90
      %s92 = sshll.u32 [#allocation11], 4
      %s93 = int_to_ptr.vmem [resolvable:$true] %s92
      %98 = dma.hbm_to_vmem [thread:$0]  %s9, 1024, %s93, [#allocation12], 64, 64, 4
    $region41: #{tpu_custom_call.1} parent=1 // pred_fallthru
      _
    // Predicated region
    $region42: #{tpu_custom_call.1} parent=1 // pred_check
      _
    $region43: #{tpu_custom_call.1} parent=1 // pred_check_branch
      %100 = sbr.rel (0) target = $region45
    $region44: #{tpu_custom_call.1} parent=1 // pred_region
      _
    $region45: #{tpu_custom_call.1} parent=1 // pred_fallthru
      _
    // Predicated region
    $region46: #{tpu_custom_call.1} parent=1 // pred_check
      _
    $region47: #{tpu_custom_call.1} parent=1 // pred_check_branch
      %102 = sbr.rel (0) target = $region49
    $region48: #{tpu_custom_call.1} parent=1 // pred_region
      %103 = dma.done [#allocation3], 128
    $region49: #{tpu_custom_call.1} parent=1 // pred_fallthru
      _
    // Predicated region
    $region50: #{tpu_custom_call.1} parent=1 // pred_check
      _
    $region51: #{tpu_custom_call.1} parent=1 // pred_check_branch
      %105 = sbr.rel (0) target = $region53
    $region52: #{tpu_custom_call.1} parent=1 // pred_region
      %106 = dma.done [#allocation6], 1024
    $region53: #{tpu_custom_call.1} parent=1 // pred_fallthru
      _
    // Predicated region
    $region54: #{tpu_custom_call.1} parent=1 // pred_check
      _
    $region55: #{tpu_custom_call.1} parent=1 // pred_check_branch
      %108 = sbr.rel (0) target = $region57
    $region56: #{tpu_custom_call.1} parent=1 // pred_region
      %109 = dma.done [#allocation6], 1024
    $region57: #{tpu_custom_call.1} parent=1 // pred_fallthru
      _
    // Predicated region
    $region58: #{tpu_custom_call.1} parent=1 // pred_check
      _
    $region59: #{tpu_custom_call.1} parent=1 // pred_check_branch
      %111 = sbr.rel (0) target = $region61
    $region60: #{tpu_custom_call.1} parent=1 // pred_region
      %112 = dma.done [#allocation9], 1024
    $region61: #{tpu_custom_call.1} parent=1 // pred_fallthru
      _
    // Predicated region
    $region62: #{tpu_custom_call.1} parent=1 // pred_check
      _
    $region63: #{tpu_custom_call.1} parent=1 // pred_check_branch
      %114 = sbr.rel (0) target = $region65
    $region64: #{tpu_custom_call.1} parent=1 // pred_region
      %115 = dma.done [#allocation9], 1024
    $region65: #{tpu_custom_call.1} parent=1 // pred_fallthru
      _
    // Predicated region
    $region66: #{tpu_custom_call.1} parent=1 // pred_check
      _
    $region67: #{tpu_custom_call.1} parent=1 // pred_check_branch
      %117 = sbr.rel (0) target = $region69
    $region68: #{tpu_custom_call.1} parent=1 // pred_region
      %118 = dma.done [#allocation12], 1024
    $region69: #{tpu_custom_call.1} parent=1 // pred_fallthru
      _
    %v120 = vld [vmem:[#allocation2] sm:$0xff]
    %v121 = vld [vmem:[#allocation5] sm:$0xf]
    %v122 = vld [vmem:[#allocation5 + $0x4] sm:$0xf]
    %v123 = vld [vmem:[#allocation5 + $0x8] sm:$0xf]
    %v124 = vld [vmem:[#allocation5 + $0xc] sm:$0xf]
    %v125 = vld [vmem:[#allocation5 + $0x10] sm:$0xf]
    %v126 = vld [vmem:[#allocation5 + $0x14] sm:$0xf]
    %v127 = vld [vmem:[#allocation5 + $0x18] sm:$0xf]
    %v128 = vld [vmem:[#allocation5 + $0x1c] sm:$0xf]
    %v129 = vld [vmem:[#allocation5 + $0x20] sm:$0xf]
    %v130 = vld [vmem:[#allocation5 + $0x24] sm:$0xf]
    %v131 = vld [vmem:[#allocation5 + $0x28] sm:$0xf]
    %v132 = vld [vmem:[#allocation5 + $0x2c] sm:$0xf]
    %v133 = vld [vmem:[#allocation5 + $0x30] sm:$0xf]
    %v134 = vld [vmem:[#allocation5 + $0x34] sm:$0xf]
    %v135 = vld [vmem:[#allocation5 + $0x38] sm:$0xf]
    %v136 = vld [vmem:[#allocation5 + $0x3c] sm:$0xf]
    %v137 = vld [vmem:[%s2] sm:$0x1]
    %v138 = vpack.c.bf16 %v120, %v120
    %v140 = vlaneseq
    %v141 = vshrl.u32 %v140, 7
    %v142 = vsub.s32 0, %v141
    %v143 = vrot.slane %v137, %v142
    %v161 = vunpack.c.l.b16 %v121
    %v162 = vunpack.c.l.b16 %v122
    %v163 = vunpack.c.l.b16 %v123
    %v164 = vunpack.c.l.b16 %v124
    %v165 = vunpack.c.l.b16 %v125
    %v166 = vunpack.c.l.b16 %v126
    %v167 = vunpack.c.l.b16 %v127
    %v168 = vunpack.c.l.b16 %v128
    %v169 = vunpack.c.l.b16 %v129
    %v170 = vunpack.c.l.b16 %v130
    %v171 = vunpack.c.l.b16 %v131
    %v172 = vunpack.c.l.b16 %v132
    %v173 = vunpack.c.l.b16 %v133
    %v174 = vunpack.c.l.b16 %v134
    %v175 = vunpack.c.l.b16 %v135
    %v176 = vunpack.c.l.b16 %v136
    %v177 = vpack.c.b16 %v162, %v161
    %v178 = vpack.c.b16 %v164, %v163
    %v179 = vpack.c.b16 %v166, %v165
    %v180 = vpack.c.b16 %v168, %v167
    %v181 = vpack.c.b16 %v170, %v169
    %v182 = vpack.c.b16 %v172, %v171
    %v183 = vpack.c.b16 %v174, %v173
    %v184 = vpack.c.b16 %v176, %v175
    %193 = vmatprep.subr.bf16.mxu0 0
    %194 = vmatpush1.bf16.msra.mxu0 %v184
    %195 = vmatprep.subr.bf16.mxu0 0
    %196 = vmatpush1.bf16.msra.mxu0 %v183
    %197 = vmatprep.subr.bf16.mxu0 0
    %198 = vmatpush1.bf16.msra.mxu0 %v182
    %199 = vmatprep.subr.bf16.mxu0 0
    %200 = vmatpush1.bf16.msra.mxu0 %v181
    %201 = vmatprep.subr.bf16.mxu0 0
    %202 = vmatpush1.bf16.msra.mxu0 %v180
    %203 = vmatprep.subr.bf16.mxu0 0
    %204 = vmatpush1.bf16.msra.mxu0 %v179
    %205 = vmatprep.subr.bf16.mxu0 0
    %206 = vmatpush1.bf16.msra.mxu0 %v178
    %207 = vmatprep.subr.bf16.mxu0 0
    %208 = vmatpush1.bf16.msra.mxu0 %v177
    %209 = vmatprep.subr.bf16.mxu0 0
    %210 = vmatpush2.bf16.msra.mxu0 0
    %211 = vmatprep.subr.bf16.mxu0 0
    %212 = vmatpush2.bf16.msra.mxu0 0
    %213 = vmatprep.subr.bf16.mxu0 0
    %214 = vmatpush2.bf16.msra.mxu0 0
    %215 = vmatprep.subr.bf16.mxu0 0
    %216 = vmatpush2.bf16.msra.mxu0 0
    %217 = vmatprep.subr.bf16.mxu0 0
    %218 = vmatpush2.bf16.msra.mxu0 0
    %219 = vmatprep.subr.bf16.mxu0 0
    %220 = vmatpush2.bf16.msra.mxu0 0
    %221 = vmatprep.subr.bf16.mxu0 0
    %222 = vmatpush2.bf16.msra.mxu0 0
    %223 = vmatprep.subr.bf16.mxu0 0
    %224 = vmatpush2.bf16.msra.mxu0 0
    %225 = vmatprep.mubr.bf16.mxu0 0
    %226 = vmatmul.mubr.bf16.gmra.mxu0 %v138
    %v227 = vpop.f32.mrf.mxu0
    %v228 = vadd.f32 %v143, %v227
    %v229 = vpop.f32.mrf.mxu0
    %v230 = vpop.f32.mrf.mxu0
    %v231 = vpop.f32.mrf.mxu0
    %232 = vdwg.mxu0
    %v233 = vmul.f32 %v228, %v228
    %v234 = vmul.f32 %v233, 0.035677407
    %v235 = vadd.f32 %v234, 0.7978846
    %v236 = vmul.f32 %v228, %v235
    %v237 = vmul.f32 %v228, 0.5
    %v238 = vtanh.pop %v236
    %v239 = vadd.f32 %v238, 1.0
    %v240 = vmul.f32 %v237, %v239
    %v241 = vadd.f32 %v120, %v240
    %v242 = vld [vmem:[#allocation7] sm:$0xf]
    %v243 = vld [vmem:[#allocation7 + $0x4] sm:$0xf]
    %v244 = vld [vmem:[#allocation7 + $0x8] sm:$0xf]
    %v245 = vld [vmem:[#allocation7 + $0xc] sm:$0xf]
    %v246 = vld [vmem:[#allocation7 + $0x10] sm:$0xf]
    %v247 = vld [vmem:[#allocation7 + $0x14] sm:$0xf]
    %v248 = vld [vmem:[#allocation7 + $0x18] sm:$0xf]
    %v249 = vld [vmem:[#allocation7 + $0x1c] sm:$0xf]
    %v250 = vld [vmem:[#allocation7 + $0x20] sm:$0xf]
    %v251 = vld [vmem:[#allocation7 + $0x24] sm:$0xf]
    %v252 = vld [vmem:[#allocation7 + $0x28] sm:$0xf]
    %v253 = vld [vmem:[#allocation7 + $0x2c] sm:$0xf]
    %v254 = vld [vmem:[#allocation7 + $0x30] sm:$0xf]
    %v255 = vld [vmem:[#allocation7 + $0x34] sm:$0xf]
    %v256 = vld [vmem:[#allocation7 + $0x38] sm:$0xf]
    %v257 = vld [vmem:[#allocation7 + $0x3c] sm:$0xf]
    %v258 = vld [vmem:[%s4] sm:$0x1]
    %v259 = vpack.c.bf16 %v241, %v241
    %v261 = vlaneseq
    %v262 = vshrl.u32 %v261, 7
    %v263 = vsub.s32 0, %v262
    %v264 = vrot.slane %v258, %v263
    %v282 = vunpack.c.l.b16 %v242
    %v283 = vunpack.c.l.b16 %v243
    %v284 = vunpack.c.l.b16 %v244
    %v285 = vunpack.c.l.b16 %v245
    %v286 = vunpack.c.l.b16 %v246
    %v287 = vunpack.c.l.b16 %v247
    %v288 = vunpack.c.l.b16 %v248
    %v289 = vunpack.c.l.b16 %v249
    %v290 = vunpack.c.l.b16 %v250
    %v291 = vunpack.c.l.b16 %v251
    %v292 = vunpack.c.l.b16 %v252
    %v293 = vunpack.c.l.b16 %v253
    %v294 = vunpack.c.l.b16 %v254
    %v295 = vunpack.c.l.b16 %v255
    %v296 = vunpack.c.l.b16 %v256
    %v297 = vunpack.c.l.b16 %v257
    %v298 = vpack.c.b16 %v283, %v282
    %v299 = vpack.c.b16 %v285, %v284
    %v300 = vpack.c.b16 %v287, %v286
    %v301 = vpack.c.b16 %v289, %v288
    %v302 = vpack.c.b16 %v291, %v290
    %v303 = vpack.c.b16 %v293, %v292
    %v304 = vpack.c.b16 %v295, %v294
    %v305 = vpack.c.b16 %v297, %v296
    %314 = vmatprep.subr.bf16.mxu0 0
    %315 = vmatpush1.bf16.msra.mxu0 %v305
    %316 = vmatprep.subr.bf16.mxu0 0
    %317 = vmatpush1.bf16.msra.mxu0 %v304
    %318 = vmatprep.subr.bf16.mxu0 0
    %319 = vmatpush1.bf16.msra.mxu0 %v303
    %320 = vmatprep.subr.bf16.mxu0 0
    %321 = vmatpush1.bf16.msra.mxu0 %v302
    %322 = vmatprep.subr.bf16.mxu0 0
    %323 = vmatpush1.bf16.msra.mxu0 %v301
    %324 = vmatprep.subr.bf16.mxu0 0
    %325 = vmatpush1.bf16.msra.mxu0 %v300
    %326 = vmatprep.subr.bf16.mxu0 0
    %327 = vmatpush1.bf16.msra.mxu0 %v299
    %328 = vmatprep.subr.bf16.mxu0 0
    %329 = vmatpush1.bf16.msra.mxu0 %v298
    %330 = vmatprep.subr.bf16.mxu0 0
    %331 = vmatpush2.bf16.msra.mxu0 0
    %332 = vmatprep.subr.bf16.mxu0 0
    %333 = vmatpush2.bf16.msra.mxu0 0
    %334 = vmatprep.subr.bf16.mxu0 0
    %335 = vmatpush2.bf16.msra.mxu0 0
    %336 = vmatprep.subr.bf16.mxu0 0
    %337 = vmatpush2.bf16.msra.mxu0 0
    %338 = vmatprep.subr.bf16.mxu0 0
    %339 = vmatpush2.bf16.msra.mxu0 0
    %340 = vmatprep.subr.bf16.mxu0 0
    %341 = vmatpush2.bf16.msra.mxu0 0
    %342 = vmatprep.subr.bf16.mxu0 0
    %343 = vmatpush2.bf16.msra.mxu0 0
    %344 = vmatprep.subr.bf16.mxu0 0
    %345 = vmatpush2.bf16.msra.mxu0 0
    %346 = vmatprep.mubr.bf16.mxu0 0
    %347 = vmatmul.mubr.bf16.gmra.mxu0 %v259
    %v348 = vpop.f32.mrf.mxu0
    %v349 = vadd.f32 %v264, %v348
    %v350 = vpop.f32.mrf.mxu0
    %v351 = vpop.f32.mrf.mxu0
    %v352 = vpop.f32.mrf.mxu0
    %353 = vdwg.mxu0
    %v354 = vmul.f32 %v349, %v349
    %v355 = vmul.f32 %v354, 0.035677407
    %v356 = vadd.f32 %v355, 0.7978846
    %v357 = vmul.f32 %v349, %v356
    %v358 = vmul.f32 %v349, 0.5
    %v359 = vtanh.pop %v357
    %v360 = vadd.f32 %v359, 1.0
    %v361 = vmul.f32 %v358, %v360
    %v362 = vadd.f32 %v241, %v361
    %v363 = vld [vmem:[#allocation8] sm:$0xf]
    %v364 = vld [vmem:[#allocation8 + $0x4] sm:$0xf]
    %v365 = vld [vmem:[#allocation8 + $0x8] sm:$0xf]
    %v366 = vld [vmem:[#allocation8 + $0xc] sm:$0xf]
    %v367 = vld [vmem:[#allocation8 + $0x10] sm:$0xf]
    %v368 = vld [vmem:[#allocation8 + $0x14] sm:$0xf]
    %v369 = vld [vmem:[#allocation8 + $0x18] sm:$0xf]
    %v370 = vld [vmem:[#allocation8 + $0x1c] sm:$0xf]
    %v371 = vld [vmem:[#allocation8 + $0x20] sm:$0xf]
    %v372 = vld [vmem:[#allocation8 + $0x24] sm:$0xf]
    %v373 = vld [vmem:[#allocation8 + $0x28] sm:$0xf]
    %v374 = vld [vmem:[#allocation8 + $0x2c] sm:$0xf]
    %v375 = vld [vmem:[#allocation8 + $0x30] sm:$0xf]
    %v376 = vld [vmem:[#allocation8 + $0x34] sm:$0xf]
    %v377 = vld [vmem:[#allocation8 + $0x38] sm:$0xf]
    %v378 = vld [vmem:[#allocation8 + $0x3c] sm:$0xf]
    %v379 = vld [vmem:[%s6] sm:$0x1]
    %v380 = vpack.c.bf16 %v362, %v362
    %v382 = vlaneseq
    %v383 = vshrl.u32 %v382, 7
    %v384 = vsub.s32 0, %v383
    %v385 = vrot.slane %v379, %v384
    %v403 = vunpack.c.l.b16 %v363
    %v404 = vunpack.c.l.b16 %v364
    %v405 = vunpack.c.l.b16 %v365
    %v406 = vunpack.c.l.b16 %v366
    %v407 = vunpack.c.l.b16 %v367
    %v408 = vunpack.c.l.b16 %v368
    %v409 = vunpack.c.l.b16 %v369
    %v410 = vunpack.c.l.b16 %v370
    %v411 = vunpack.c.l.b16 %v371
    %v412 = vunpack.c.l.b16 %v372
    %v413 = vunpack.c.l.b16 %v373
    %v414 = vunpack.c.l.b16 %v374
    %v415 = vunpack.c.l.b16 %v375
    %v416 = vunpack.c.l.b16 %v376
    %v417 = vunpack.c.l.b16 %v377
    %v418 = vunpack.c.l.b16 %v378
    %v419 = vpack.c.b16 %v404, %v403
    %v420 = vpack.c.b16 %v406, %v405
    %v421 = vpack.c.b16 %v408, %v407
    %v422 = vpack.c.b16 %v410, %v409
    %v423 = vpack.c.b16 %v412, %v411
    %v424 = vpack.c.b16 %v414, %v413
    %v425 = vpack.c.b16 %v416, %v415
    %v426 = vpack.c.b16 %v418, %v417
    %435 = vmatprep.subr.bf16.mxu0 0
    %436 = vmatpush1.bf16.msra.mxu0 %v426
    %437 = vmatprep.subr.bf16.mxu0 0
    %438 = vmatpush1.bf16.msra.mxu0 %v425
    %439 = vmatprep.subr.bf16.mxu0 0
    %440 = vmatpush1.bf16.msra.mxu0 %v424
    %441 = vmatprep.subr.bf16.mxu0 0
    %442 = vmatpush1.bf16.msra.mxu0 %v423
    %443 = vmatprep.subr.bf16.mxu0 0
    %444 = vmatpush1.bf16.msra.mxu0 %v422
    %445 = vmatprep.subr.bf16.mxu0 0
    %446 = vmatpush1.bf16.msra.mxu0 %v421
    %447 = vmatprep.subr.bf16.mxu0 0
    %448 = vmatpush1.bf16.msra.mxu0 %v420
    %449 = vmatprep.subr.bf16.mxu0 0
    %450 = vmatpush1.bf16.msra.mxu0 %v419
    %451 = vmatprep.subr.bf16.mxu0 0
    %452 = vmatpush2.bf16.msra.mxu0 0
    %453 = vmatprep.subr.bf16.mxu0 0
    %454 = vmatpush2.bf16.msra.mxu0 0
    %455 = vmatprep.subr.bf16.mxu0 0
    %456 = vmatpush2.bf16.msra.mxu0 0
    %457 = vmatprep.subr.bf16.mxu0 0
    %458 = vmatpush2.bf16.msra.mxu0 0
    %459 = vmatprep.subr.bf16.mxu0 0
    %460 = vmatpush2.bf16.msra.mxu0 0
    %461 = vmatprep.subr.bf16.mxu0 0
    %462 = vmatpush2.bf16.msra.mxu0 0
    %463 = vmatprep.subr.bf16.mxu0 0
    %464 = vmatpush2.bf16.msra.mxu0 0
    %465 = vmatprep.subr.bf16.mxu0 0
    %466 = vmatpush2.bf16.msra.mxu0 0
    %467 = vmatprep.mubr.bf16.mxu0 0
    %468 = vmatmul.mubr.bf16.gmra.mxu0 %v380
    %v469 = vpop.f32.mrf.mxu0
    %v470 = vadd.f32 %v385, %v469
    %v471 = vpop.f32.mrf.mxu0
    %v472 = vpop.f32.mrf.mxu0
    %v473 = vpop.f32.mrf.mxu0
    %474 = vdwg.mxu0
    %v475 = vmul.f32 %v470, %v470
    %v476 = vmul.f32 %v475, 0.035677407
    %v477 = vadd.f32 %v476, 0.7978846
    %v478 = vmul.f32 %v470, %v477
    %v479 = vmul.f32 %v470, 0.5
    %v480 = vtanh.pop %v478
    %v481 = vadd.f32 %v480, 1.0
    %v482 = vmul.f32 %v479, %v481
    %v483 = vadd.f32 %v362, %v482
    %v484 = vld [vmem:[#allocation10] sm:$0xf]
    %v485 = vld [vmem:[#allocation10 + $0x4] sm:$0xf]
    %v486 = vld [vmem:[#allocation10 + $0x8] sm:$0xf]
    %v487 = vld [vmem:[#allocation10 + $0xc] sm:$0xf]
    %v488 = vld [vmem:[#allocation10 + $0x10] sm:$0xf]
    %v489 = vld [vmem:[#allocation10 + $0x14] sm:$0xf]
    %v490 = vld [vmem:[#allocation10 + $0x18] sm:$0xf]
    %v491 = vld [vmem:[#allocation10 + $0x1c] sm:$0xf]
    %v492 = vld [vmem:[#allocation10 + $0x20] sm:$0xf]
    %v493 = vld [vmem:[#allocation10 + $0x24] sm:$0xf]
    %v494 = vld [vmem:[#allocation10 + $0x28] sm:$0xf]
    %v495 = vld [vmem:[#allocation10 + $0x2c] sm:$0xf]
    %v496 = vld [vmem:[#allocation10 + $0x30] sm:$0xf]
    %v497 = vld [vmem:[#allocation10 + $0x34] sm:$0xf]
    %v498 = vld [vmem:[#allocation10 + $0x38] sm:$0xf]
    %v499 = vld [vmem:[#allocation10 + $0x3c] sm:$0xf]
    %v500 = vld [vmem:[%s8] sm:$0x1]
    %v501 = vpack.c.bf16 %v483, %v483
    %v503 = vlaneseq
    %v504 = vshrl.u32 %v503, 7
    %v505 = vsub.s32 0, %v504
    %v506 = vrot.slane %v500, %v505
    %v524 = vunpack.c.l.b16 %v484
    %v525 = vunpack.c.l.b16 %v485
    %v526 = vunpack.c.l.b16 %v486
    %v527 = vunpack.c.l.b16 %v487
    %v528 = vunpack.c.l.b16 %v488
    %v529 = vunpack.c.l.b16 %v489
    %v530 = vunpack.c.l.b16 %v490
    %v531 = vunpack.c.l.b16 %v491
    %v532 = vunpack.c.l.b16 %v492
    %v533 = vunpack.c.l.b16 %v493
    %v534 = vunpack.c.l.b16 %v494
    %v535 = vunpack.c.l.b16 %v495
    %v536 = vunpack.c.l.b16 %v496
    %v537 = vunpack.c.l.b16 %v497
    %v538 = vunpack.c.l.b16 %v498
    %v539 = vunpack.c.l.b16 %v499
    %v540 = vpack.c.b16 %v525, %v524
    %v541 = vpack.c.b16 %v527, %v526
    %v542 = vpack.c.b16 %v529, %v528
    %v543 = vpack.c.b16 %v531, %v530
    %v544 = vpack.c.b16 %v533, %v532
    %v545 = vpack.c.b16 %v535, %v534
    %v546 = vpack.c.b16 %v537, %v536
    %v547 = vpack.c.b16 %v539, %v538
    %556 = vmatprep.subr.bf16.mxu0 0
    %557 = vmatpush1.bf16.msra.mxu0 %v547
    %558 = vmatprep.subr.bf16.mxu0 0
    %559 = vmatpush1.bf16.msra.mxu0 %v546
    %560 = vmatprep.subr.bf16.mxu0 0
    %561 = vmatpush1.bf16.msra.mxu0 %v545
    %562 = vmatprep.subr.bf16.mxu0 0
    %563 = vmatpush1.bf16.msra.mxu0 %v544
    %564 = vmatprep.subr.bf16.mxu0 0
    %565 = vmatpush1.bf16.msra.mxu0 %v543
    %566 = vmatprep.subr.bf16.mxu0 0
    %567 = vmatpush1.bf16.msra.mxu0 %v542
    %568 = vmatprep.subr.bf16.mxu0 0
    %569 = vmatpush1.bf16.msra.mxu0 %v541
    %570 = vmatprep.subr.bf16.mxu0 0
    %571 = vmatpush1.bf16.msra.mxu0 %v540
    %572 = vmatprep.subr.bf16.mxu0 0
    %573 = vmatpush2.bf16.msra.mxu0 0
    %574 = vmatprep.subr.bf16.mxu0 0
    %575 = vmatpush2.bf16.msra.mxu0 0
    %576 = vmatprep.subr.bf16.mxu0 0
    %577 = vmatpush2.bf16.msra.mxu0 0
    %578 = vmatprep.subr.bf16.mxu0 0
    %579 = vmatpush2.bf16.msra.mxu0 0
    %580 = vmatprep.subr.bf16.mxu0 0
    %581 = vmatpush2.bf16.msra.mxu0 0
    %582 = vmatprep.subr.bf16.mxu0 0
    %583 = vmatpush2.bf16.msra.mxu0 0
    %584 = vmatprep.subr.bf16.mxu0 0
    %585 = vmatpush2.bf16.msra.mxu0 0
    %586 = vmatprep.subr.bf16.mxu0 0
    %587 = vmatpush2.bf16.msra.mxu0 0
    %588 = vmatprep.mubr.bf16.mxu0 0
    %589 = vmatmul.mubr.bf16.gmra.mxu0 %v501
    %v590 = vpop.f32.mrf.mxu0
    %v591 = vadd.f32 %v506, %v590
    %v592 = vpop.f32.mrf.mxu0
    %v593 = vpop.f32.mrf.mxu0
    %v594 = vpop.f32.mrf.mxu0
    %595 = vdwg.mxu0
    %v596 = vmul.f32 %v591, %v591
    %v597 = vmul.f32 %v596, 0.035677407
    %v598 = vadd.f32 %v597, 0.7978846
    %v599 = vmul.f32 %v591, %v598
    %v600 = vmul.f32 %v591, 0.5
    %v601 = vtanh.pop %v599
    %v602 = vadd.f32 %v601, 1.0
    %v603 = vmul.f32 %v600, %v602
    %v604 = vadd.f32 %v483, %v603
    %v605 = vld [vmem:[#allocation11] sm:$0xf]
    %v606 = vld [vmem:[#allocation11 + $0x4] sm:$0xf]
    %v607 = vld [vmem:[#allocation11 + $0x8] sm:$0xf]
    %v608 = vld [vmem:[#allocation11 + $0xc] sm:$0xf]
    %v609 = vld [vmem:[#allocation11 + $0x10] sm:$0xf]
    %v610 = vld [vmem:[#allocation11 + $0x14] sm:$0xf]
    %v611 = vld [vmem:[#allocation11 + $0x18] sm:$0xf]
    %v612 = vld [vmem:[#allocation11 + $0x1c] sm:$0xf]
    %v613 = vld [vmem:[#allocation11 + $0x20] sm:$0xf]
    %v614 = vld [vmem:[#allocation11 + $0x24] sm:$0xf]
    %v615 = vld [vmem:[#allocation11 + $0x28] sm:$0xf]
    %v616 = vld [vmem:[#allocation11 + $0x2c] sm:$0xf]
    %v617 = vld [vmem:[#allocation11 + $0x30] sm:$0xf]
    %v618 = vld [vmem:[#allocation11 + $0x34] sm:$0xf]
    %v619 = vld [vmem:[#allocation11 + $0x38] sm:$0xf]
    %v620 = vld [vmem:[#allocation11 + $0x3c] sm:$0xf]
    %v621 = vld [vmem:[%s10] sm:$0x1]
    %v622 = vpack.c.bf16 %v604, %v604
    %v624 = vlaneseq
    %v625 = vshrl.u32 %v624, 7
    %v626 = vsub.s32 0, %v625
    %v627 = vrot.slane %v621, %v626
    %v645 = vunpack.c.l.b16 %v605
    %v646 = vunpack.c.l.b16 %v606
    %v647 = vunpack.c.l.b16 %v607
    %v648 = vunpack.c.l.b16 %v608
    %v649 = vunpack.c.l.b16 %v609
    %v650 = vunpack.c.l.b16 %v610
    %v651 = vunpack.c.l.b16 %v611
    %v652 = vunpack.c.l.b16 %v612
    %v653 = vunpack.c.l.b16 %v613
    %v654 = vunpack.c.l.b16 %v614
    %v655 = vunpack.c.l.b16 %v615
    %v656 = vunpack.c.l.b16 %v616
    %v657 = vunpack.c.l.b16 %v617
    %v658 = vunpack.c.l.b16 %v618
    %v659 = vunpack.c.l.b16 %v619
    %v660 = vunpack.c.l.b16 %v620
    %v661 = vpack.c.b16 %v646, %v645
    %v662 = vpack.c.b16 %v648, %v647
    %v663 = vpack.c.b16 %v650, %v649
    %v664 = vpack.c.b16 %v652, %v651
    %v665 = vpack.c.b16 %v654, %v653
    %v666 = vpack.c.b16 %v656, %v655
    %v667 = vpack.c.b16 %v658, %v657
    %v668 = vpack.c.b16 %v660, %v659
    %677 = vmatprep.subr.bf16.mxu0 0
    %678 = vmatpush1.bf16.msra.mxu0 %v668
    %679 = vmatprep.subr.bf16.mxu0 0
    %680 = vmatpush1.bf16.msra.mxu0 %v667
    %681 = vmatprep.subr.bf16.mxu0 0
    %682 = vmatpush1.bf16.msra.mxu0 %v666
    %683 = vmatprep.subr.bf16.mxu0 0
    %684 = vmatpush1.bf16.msra.mxu0 %v665
    %685 = vmatprep.subr.bf16.mxu0 0
    %686 = vmatpush1.bf16.msra.mxu0 %v664
    %687 = vmatprep.subr.bf16.mxu0 0
    %688 = vmatpush1.bf16.msra.mxu0 %v663
    %689 = vmatprep.subr.bf16.mxu0 0
    %690 = vmatpush1.bf16.msra.mxu0 %v662
    %691 = vmatprep.subr.bf16.mxu0 0
    %692 = vmatpush1.bf16.msra.mxu0 %v661
    %693 = vmatprep.subr.bf16.mxu0 0
    %694 = vmatpush2.bf16.msra.mxu0 0
    %695 = vmatprep.subr.bf16.mxu0 0
    %696 = vmatpush2.bf16.msra.mxu0 0
    %697 = vmatprep.subr.bf16.mxu0 0
    %698 = vmatpush2.bf16.msra.mxu0 0
    %699 = vmatprep.subr.bf16.mxu0 0
    %700 = vmatpush2.bf16.msra.mxu0 0
    %701 = vmatprep.subr.bf16.mxu0 0
    %702 = vmatpush2.bf16.msra.mxu0 0
    %703 = vmatprep.subr.bf16.mxu0 0
    %704 = vmatpush2.bf16.msra.mxu0 0
    %705 = vmatprep.subr.bf16.mxu0 0
    %706 = vmatpush2.bf16.msra.mxu0 0
    %707 = vmatprep.subr.bf16.mxu0 0
    %708 = vmatpush2.bf16.msra.mxu0 0
    %709 = vmatprep.mubr.bf16.mxu0 0
    %710 = vmatmul.mubr.bf16.gmra.mxu0 %v622
    %v711 = vpop.f32.mrf.mxu0
    %v712 = vadd.f32 %v627, %v711
    %v713 = vpop.f32.mrf.mxu0
    %v714 = vpop.f32.mrf.mxu0
    %v715 = vpop.f32.mrf.mxu0
    %716 = vdwg.mxu0
    %v717 = vmul.f32 %v712, %v712
    %v718 = vmul.f32 %v717, 0.035677407
    %v719 = vadd.f32 %v718, 0.7978846
    %v720 = vmul.f32 %v712, %v719
    %v721 = vmul.f32 %v712, 0.5
    %v722 = vtanh.pop %v720
    %v723 = vadd.f32 %v722, 1.0
    %v724 = vmul.f32 %v721, %v723
    %725 = vst [vmem:[#allocation13] sm:$0xff] %v724
    // Predicated region
    $region70: #{tpu_custom_call.1} parent=1 // pred_check
      _
    $region71: #{tpu_custom_call.1} parent=1 // pred_check_branch
      %727 = sbr.rel (0) target = $region73
    $region72: #{tpu_custom_call.1} parent=1 // pred_region
      %s729 = ssub.s32 128, 128
      %730 = vsyncadd [#allocation4], %s729
      %s732 = sshll.u32 [#allocation13], 4
      %s733 = int_to_ptr.vmem [resolvable:$true] %s732
      %735 = dma.vmem_to_hbm [thread:$0]  %s733, 128, %s11, [#allocation4]
    $region73: #{tpu_custom_call.1} parent=1 // pred_fallthru
      _
    // Predicated region
    $region74: #{tpu_custom_call.1} parent=1 // pred_check
      _
    $region75: #{tpu_custom_call.1} parent=1 // pred_check_branch
      %737 = sbr.rel (0) target = $region77
    $region76: #{tpu_custom_call.1} parent=1 // pred_region
      %738 = dma.done [#allocation4], 128
    $region77: #{tpu_custom_call.1} parent=1 // pred_fallthru
      _
    %739 = vsyncpa [#allocation3], 1
    %740 = vsyncpa [#allocation6], 1
    %741 = vsyncpa [#allocation9], 1
    %742 = vsyncpa [#allocation12], 1
    %743 = vsyncpa [#allocation4], 1

// kernel: tpu_custom_call.1
$region0: #{tpu_custom_call.1}
  #allocation0 [shape = 'u32[]', space=smem, size = 0x4, offset = 0x4, fixed_abs, tag = 'smem constant byte address 0x4 - core index']
  #allocation1 [shape = 'u32[144,128]{1,0:T(1,128)}', space=vmem, size = 0x12000, scoped, tag = 'internal scratch']
  %s0 = inlined_call_operand.hbm [shape: f32[8,128], index: 0, kind: input, shape index: {}]
  %s1 = inlined_call_operand.hbm [shape: bf16[128,128], index: 1, kind: input, shape index: {}]
  %s2 = inlined_call_operand.vmem [shape: f32[1,128], index: 2, kind: input, shape index: {}]
  %s3 = inlined_call_operand.hbm [shape: bf16[128,128], index: 3, kind: input, shape index: {}]
  %s4 = inlined_call_operand.vmem [shape: f32[1,128], index: 4, kind: input, shape index: {}]
  %s5 = inlined_call_operand.hbm [shape: bf16[128,128], index: 5, kind: input, shape index: {}]
  %s6 = inlined_call_operand.vmem [shape: f32[1,128], index: 6, kind: input, shape index: {}]
  %s7 = inlined_call_operand.hbm [shape: bf16[128,128], index: 7, kind: input, shape index: {}]
  %s8 = inlined_call_operand.vmem [shape: f32[1,128], index: 8, kind: input, shape index: {}]
  %s9 = inlined_call_operand.hbm [shape: bf16[128,128], index: 9, kind: input, shape index: {}]
  %s10 = inlined_call_operand.vmem [shape: f32[1,128], index: 10, kind: input, shape index: {}]
  %s11 = inlined_call_operand.hbm [shape: f32[8,128], index: 11, kind: output, shape index: {}]
  %s12 = sld [smem:[#allocation0]]
  $region78: #{tpu_custom_call.1} parent=0
    _
  %s14 = ssub.s32 1, %s12
  %s15 = scalar_select 0, %s14, %s12
  $region1: #{tpu_custom_call.1} parent=0
    #allocation2 [shape = 'u8[4096]{0}', space=vmem, size = 0x1000, scoped, tag = 'input window, operand 0, single buffered']
    #allocation3 [shape = 's32[1]{0}', space=sflag, size = 0x4, scoped, tag = 'scoped memory for tpu_custom_call.1']
    #allocation4 [shape = 's32[1]{0}', space=sflag, size = 0x4, scoped, tag = 'scoped memory for tpu_custom_call.1']
    #allocation5 [shape = 'u8[32768]{0}', space=vmem, size = 0x8000, scoped, tag = 'input window, operand 1, single buffered']
    #allocation6 [shape = 's32[1]{0}', space=sflag, size = 0x4, scoped, tag = 'scoped memory for tpu_custom_call.1']
    #allocation7 [shape = 'u8[32768]{0}', space=vmem, size = 0x8000, scoped, tag = 'input window, operand 3, single buffered']
    #allocation8 [shape = 'u8[32768]{0}', space=vmem, size = 0x8000, scoped, tag = 'input window, operand 5, single buffered']
    #allocation9 [shape = 's32[1]{0}', space=sflag, size = 0x4, scoped, tag = 'scoped memory for tpu_custom_call.1']
    #allocation10 [shape = 'u8[32768]{0}', space=vmem, size = 0x8000, scoped, tag = 'input window, operand 7, single buffered']
    #allocation11 [shape = 'u8[32768]{0}', space=vmem, size = 0x8000, scoped, tag = 'input window, operand 9, single buffered']
    #allocation12 [shape = 's32[1]{0}', space=sflag, size = 0x4, scoped, tag = 'scoped memory for tpu_custom_call.1']
    #allocation13 [shape = 'u8[4096]{0}', space=vmem, size = 0x1000, scoped, tag = 'output window, operand 0, single buffered']
    %16 = vsyncpa [#allocation3], 0
    %17 = vsyncpa [#allocation6], 0
    %18 = vsyncpa [#allocation9], 0
    %19 = vsyncpa [#allocation12], 0
    %20 = vsyncpa [#allocation4], 0
    // Predicated region
    $region2: #{tpu_custom_call.1} parent=1 // pred_check
      _
    $region3: #{tpu_custom_call.1} parent=1 // pred_check_branch
      %22 = sbr.rel (0) target = $region5
    $region4: #{tpu_custom_call.1} parent=1 // pred_region
      %s24 = ssub.s32 128, 128
      %25 = vsyncadd [#allocation3], %s24
      %s27 = sshll.u32 [#allocation2], 4
      %s28 = int_to_ptr.vmem [resolvable:$true] %s27
      %30 = dma.hbm_to_vmem [thread:$0]  %s0, 128, %s28, [#allocation3]
    $region5: #{tpu_custom_call.1} parent=1 // pred_fallthru
      _
    // Predicated region
    $region6: #{tpu_custom_call.1} parent=1 // pred_check
      _
    $region7: #{tpu_custom_call.1} parent=1 // pred_check_branch
      %32 = sbr.rel (0) target = $region9
    $region8: #{tpu_custom_call.1} parent=1 // pred_region
      %s34 = ssub.s32 1024, 1024
      %35 = vsyncadd [#allocation6], %s34
      %s36 = sshll.u32 [#allocation5], 4
      %s37 = int_to_ptr.vmem [resolvable:$true] %s36
      %42 = dma.hbm_to_vmem [thread:$0]  %s1, 1024, %s37, [#allocation6], 64, 64, 4
    $region9: #{tpu_custom_call.1} parent=1 // pred_fallthru
      _
    // Predicated region
    $region10: #{tpu_custom_call.1} parent=1 // pred_check
      _
    $region11: #{tpu_custom_call.1} parent=1 // pred_check_branch
      %44 = sbr.rel (0) target = $region13
    $region12: #{tpu_custom_call.1} parent=1 // pred_region
      _
    $region13: #{tpu_custom_call.1} parent=1 // pred_fallthru
      _
    // Predicated region
    $region14: #{tpu_custom_call.1} parent=1 // pred_check
      _
    $region15: #{tpu_custom_call.1} parent=1 // pred_check_branch
      %46 = sbr.rel (0) target = $region17
    $region16: #{tpu_custom_call.1} parent=1 // pred_region
      %s48 = ssub.s32 1024, 1024
      %49 = vsyncadd [#allocation6], %s48
      %s50 = sshll.u32 [#allocation7], 4
      %s51 = int_to_ptr.vmem [resolvable:$true] %s50
      %56 = dma.hbm_to_vmem [thread:$0]  %s3, 1024, %s51, [#allocation6], 64, 64, 4
    $region17: #{tpu_custom_call.1} parent=1 // pred_fallthru
      _
    // Predicated region
    $region18: #{tpu_custom_call.1} parent=1 // pred_check
      _
    $region19: #{tpu_custom_call.1} parent=1 // pred_check_branch
      %58 = sbr.rel (0) target = $region21
    $region20: #{tpu_custom_call.1} parent=1 // pred_region
      _
    $region21: #{tpu_custom_call.1} parent=1 // pred_fallthru
      _
    // Predicated region
    $region22: #{tpu_custom_call.1} parent=1 // pred_check
      _
    $region23: #{tpu_custom_call.1} parent=1 // pred_check_branch
      %60 = sbr.rel (0) target = $region25
    $region24: #{tpu_custom_call.1} parent=1 // pred_region
      %s62 = ssub.s32 1024, 1024
      %63 = vsyncadd [#allocation9], %s62
      %s64 = sshll.u32 [#allocation8], 4
      %s65 = int_to_ptr.vmem [resolvable:$true] %s64
      %70 = dma.hbm_to_vmem [thread:$0]  %s5, 1024, %s65, [#allocation9], 64, 64, 4
    $region25: #{tpu_custom_call.1} parent=1 // pred_fallthru
      _
    // Predicated region
    $region26: #{tpu_custom_call.1} parent=1 // pred_check
      _
    $region27: #{tpu_custom_call.1} parent=1 // pred_check_branch
      %72 = sbr.rel (0) target = $region29
    $region28: #{tpu_custom_call.1} parent=1 // pred_region
      _
    $region29: #{tpu_custom_call.1} parent=1 // pred_fallthru
      _
    // Predicated region
    $region30: #{tpu_custom_call.1} parent=1 // pred_check
      _
    $region31: #{tpu_custom_call.1} parent=1 // pred_check_branch
      %74 = sbr.rel (0) target = $region33
    $region32: #{tpu_custom_call.1} parent=1 // pred_region
      %s76 = ssub.s32 1024, 1024
      %77 = vsyncadd [#allocation9], %s76
      %s78 = sshll.u32 [#allocation10], 4
      %s79 = int_to_ptr.vmem [resolvable:$true] %s78
      %84 = dma.hbm_to_vmem [thread:$0]  %s7, 1024, %s79, [#allocation9], 64, 64, 4
    $region33: #{tpu_custom_call.1} parent=1 // pred_fallthru
      _
    // Predicated region
    $region34: #{tpu_custom_call.1} parent=1 // pred_check
      _
    $region35: #{tpu_custom_call.1} parent=1 // pred_check_branch
      %86 = sbr.rel (0) target = $region37
    $region36: #{tpu_custom_call.1} parent=1 // pred_region
      _
    $region37: #{tpu_custom_call.1} parent=1 // pred_fallthru
      _
    // Predicated region
    $region38: #{tpu_custom_call.1} parent=1 // pred_check
      _
    $region39: #{tpu_custom_call.1} parent=1 // pred_check_branch
      %88 = sbr.rel (0) target = $region41
    $region40: #{tpu_custom_call.1} parent=1 // pred_region
      %s90 = ssub.s32 1024, 1024
      %91 = vsyncadd [#allocation12], %s90
      %s92 = sshll.u32 [#allocation11], 4
      %s93 = int_to_ptr.vmem [resolvable:$true] %s92
      %98 = dma.hbm_to_vmem [thread:$0]  %s9, 1024, %s93, [#allocation12], 64, 64, 4
    $region41: #{tpu_custom_call.1} parent=1 // pred_fallthru
      _
    // Predicated region
    $region42: #{tpu_custom_call.1} parent=1 // pred_check
      _
    $region43: #{tpu_custom_call.1} parent=1 // pred_check_branch
      %100 = sbr.rel (0) target = $region45
    $region44: #{tpu_custom_call.1} parent=1 // pred_region
      _
    $region45: #{tpu_custom_call.1} parent=1 // pred_fallthru
      _
    // Predicated region
    $region46: #{tpu_custom_call.1} parent=1 // pred_check
      _
    $region47: #{tpu_custom_call.1} parent=1 // pred_check_branch
      %102 = sbr.rel (0) target = $region49
    $region48: #{tpu_custom_call.1} parent=1 // pred_region
      %103 = dma.done [#allocation3], 128
    $region49: #{tpu_custom_call.1} parent=1 // pred_fallthru
      _
    // Predicated region
    $region50: #{tpu_custom_call.1} parent=1 // pred_check
      _
    $region51: #{tpu_custom_call.1} parent=1 // pred_check_branch
      %105 = sbr.rel (0) target = $region53
    $region52: #{tpu_custom_call.1} parent=1 // pred_region
      %106 = dma.done [#allocation6], 1024
    $region53: #{tpu_custom_call.1} parent=1 // pred_fallthru
      _
    // Predicated region
    $region54: #{tpu_custom_call.1} parent=1 // pred_check
      _
    $region55: #{tpu_custom_call.1} parent=1 // pred_check_branch
      %108 = sbr.rel (0) target = $region57
    $region56: #{tpu_custom_call.1} parent=1 // pred_region
      %109 = dma.done [#allocation6], 1024
    $region57: #{tpu_custom_call.1} parent=1 // pred_fallthru
      _
    // Predicated region
    $region58: #{tpu_custom_call.1} parent=1 // pred_check
      _
    $region59: #{tpu_custom_call.1} parent=1 // pred_check_branch
      %111 = sbr.rel (0) target = $region61
    $region60: #{tpu_custom_call.1} parent=1 // pred_region
      %112 = dma.done [#allocation9], 1024
    $region61: #{tpu_custom_call.1} parent=1 // pred_fallthru
      _
    // Predicated region
    $region62: #{tpu_custom_call.1} parent=1 // pred_check
      _
    $region63: #{tpu_custom_call.1} parent=1 // pred_check_branch
      %114 = sbr.rel (0) target = $region65
    $region64: #{tpu_custom_call.1} parent=1 // pred_region
      %115 = dma.done [#allocation9], 1024
    $region65: #{tpu_custom_call.1} parent=1 // pred_fallthru
      _
    // Predicated region
    $region66: #{tpu_custom_call.1} parent=1 // pred_check
      _
    $region67: #{tpu_custom_call.1} parent=1 // pred_check_branch
      %117 = sbr.rel (0) target = $region69
    $region68: #{tpu_custom_call.1} parent=1 // pred_region
      %118 = dma.done [#allocation12], 1024
    $region69: #{tpu_custom_call.1} parent=1 // pred_fallthru
      _
    %v120 = vld [vmem:[#allocation2] sm:$0xff]
    %v121 = vld [vmem:[#allocation5] sm:$0xf]
    %v122 = vld [vmem:[#allocation5 + $0x4] sm:$0xf]
    %v123 = vld [vmem:[#allocation5 + $0x8] sm:$0xf]
    %v124 = vld [vmem:[#allocation5 + $0xc] sm:$0xf]
    %v125 = vld [vmem:[#allocation5 + $0x10] sm:$0xf]
    %v126 = vld [vmem:[#allocation5 + $0x14] sm:$0xf]
    %v127 = vld [vmem:[#allocation5 + $0x18] sm:$0xf]
    %v128 = vld [vmem:[#allocation5 + $0x1c] sm:$0xf]
    %v129 = vld [vmem:[#allocation5 + $0x20] sm:$0xf]
    %v130 = vld [vmem:[#allocation5 + $0x24] sm:$0xf]
    %v131 = vld [vmem:[#allocation5 + $0x28] sm:$0xf]
    %v132 = vld [vmem:[#allocation5 + $0x2c] sm:$0xf]
    %v133 = vld [vmem:[#allocation5 + $0x30] sm:$0xf]
    %v134 = vld [vmem:[#allocation5 + $0x34] sm:$0xf]
    %v135 = vld [vmem:[#allocation5 + $0x38] sm:$0xf]
    %v136 = vld [vmem:[#allocation5 + $0x3c] sm:$0xf]
    %v137 = vld [vmem:[%s2] sm:$0x1]
    %v138 = vpack.c.bf16 %v120, %v120
    %v140 = vlaneseq
    %v141 = vshrl.u32 %v140, 7
    %v142 = vsub.s32 0, %v141
    %v143 = vrot.slane %v137, %v142
    %v161 = vunpack.c.l.b16 %v121
    %v162 = vunpack.c.l.b16 %v122
    %v163 = vunpack.c.l.b16 %v123
    %v164 = vunpack.c.l.b16 %v124
    %v165 = vunpack.c.l.b16 %v125
    %v166 = vunpack.c.l.b16 %v126
    %v167 = vunpack.c.l.b16 %v127
    %v168 = vunpack.c.l.b16 %v128
    %v169 = vunpack.c.l.b16 %v129
    %v170 = vunpack.c.l.b16 %v130
    %v171 = vunpack.c.l.b16 %v131
    %v172 = vunpack.c.l.b16 %v132
    %v173 = vunpack.c.l.b16 %v133
    %v174 = vunpack.c.l.b16 %v134
    %v175 = vunpack.c.l.b16 %v135
    %v176 = vunpack.c.l.b16 %v136
    %v177 = vpack.c.b16 %v162, %v161
    %v178 = vpack.c.b16 %v164, %v163
    %v179 = vpack.c.b16 %v166, %v165
    %v180 = vpack.c.b16 %v168, %v167
    %v181 = vpack.c.b16 %v170, %v169
    %v182 = vpack.c.b16 %v172, %v171
    %v183 = vpack.c.b16 %v174, %v173
    %v184 = vpack.c.b16 %v176, %v175
    %193 = vmatprep.subr.bf16.mxu0 0
    %194 = vmatpush1.bf16.msra.mxu0 %v184
    %195 = vmatprep.subr.bf16.mxu0 0
    %196 = vmatpush1.bf16.msra.mxu0 %v183
    %197 = vmatprep.subr.bf16.mxu0 0
    %198 = vmatpush1.bf16.msra.mxu0 %v182
    %199 = vmatprep.subr.bf16.mxu0 0
    %200 = vmatpush1.bf16.msra.mxu0 %v181
    %201 = vmatprep.subr.bf16.mxu0 0
    %202 = vmatpush1.bf16.msra.mxu0 %v180
    %203 = vmatprep.subr.bf16.mxu0 0
    %204 = vmatpush1.bf16.msra.mxu0 %v179
    %205 = vmatprep.subr.bf16.mxu0 0
    %206 = vmatpush1.bf16.msra.mxu0 %v178
    %207 = vmatprep.subr.bf16.mxu0 0
    %208 = vmatpush1.bf16.msra.mxu0 %v177
    %209 = vmatprep.subr.bf16.mxu0 0
    %210 = vmatpush2.bf16.msra.mxu0 0
    %211 = vmatprep.subr.bf16.mxu0 0
    %212 = vmatpush2.bf16.msra.mxu0 0
    %213 = vmatprep.subr.bf16.mxu0 0
    %214 = vmatpush2.bf16.msra.mxu0 0
    %215 = vmatprep.subr.bf16.mxu0 0
    %216 = vmatpush2.bf16.msra.mxu0 0
    %217 = vmatprep.subr.bf16.mxu0 0
    %218 = vmatpush2.bf16.msra.mxu0 0
    %219 = vmatprep.subr.bf16.mxu0 0
    %220 = vmatpush2.bf16.msra.mxu0 0
    %221 = vmatprep.subr.bf16.mxu0 0
    %222 = vmatpush2.bf16.msra.mxu0 0
    %223 = vmatprep.subr.bf16.mxu0 0
    %224 = vmatpush2.bf16.msra.mxu0 0
    %225 = vmatprep.mubr.bf16.mxu0 0
    %226 = vmatmul.mubr.bf16.gmra.mxu0 %v138
    %v227 = vpop.f32.mrf.mxu0
    %v228 = vadd.f32 %v143, %v227
    %v229 = vpop.f32.mrf.mxu0
    %v230 = vpop.f32.mrf.mxu0
    %v231 = vpop.f32.mrf.mxu0
    %232 = vdwg.mxu0
    %v233 = vmul.f32 %v228, %v228
    %v234 = vmul.f32 %v233, 0.035677407
    %v235 = vadd.f32 %v234, 0.7978846
    %v236 = vmul.f32 %v228, %v235
    %v237 = vmul.f32 %v228, 0.5
    %v238 = vtanh.pop %v236
    %v239 = vadd.f32 %v238, 1.0
    %v240 = vmul.f32 %v237, %v239
    %v241 = vadd.f32 %v120, %v240
    %v242 = vld [vmem:[#allocation7] sm:$0xf]
    %v243 = vld [vmem:[#allocation7 + $0x4] sm:$0xf]
    %v244 = vld [vmem:[#allocation7 + $0x8] sm:$0xf]
    %v245 = vld [vmem:[#allocation7 + $0xc] sm:$0xf]
    %v246 = vld [vmem:[#allocation7 + $0x10] sm:$0xf]
    %v247 = vld [vmem:[#allocation7 + $0x14] sm:$0xf]
    %v248 = vld [vmem:[#allocation7 + $0x18] sm:$0xf]
    %v249 = vld [vmem:[#allocation7 + $0x1c] sm:$0xf]
    %v250 = vld [vmem:[#allocation7 + $0x20] sm:$0xf]
    %v251 = vld [vmem:[#allocation7 + $0x24] sm:$0xf]
    %v252 = vld [vmem:[#allocation7 + $0x28] sm:$0xf]
    %v253 = vld [vmem:[#allocation7 + $0x2c] sm:$0xf]
    %v254 = vld [vmem:[#allocation7 + $0x30] sm:$0xf]
    %v255 = vld [vmem:[#allocation7 + $0x34] sm:$0xf]
    %v256 = vld [vmem:[#allocation7 + $0x38] sm:$0xf]
    %v257 = vld [vmem:[#allocation7 + $0x3c] sm:$0xf]
    %v258 = vld [vmem:[%s4] sm:$0x1]
    %v259 = vpack.c.bf16 %v241, %v241
    %v261 = vlaneseq
    %v262 = vshrl.u32 %v261, 7
    %v263 = vsub.s32 0, %v262
    %v264 = vrot.slane %v258, %v263
    %v282 = vunpack.c.l.b16 %v242
    %v283 = vunpack.c.l.b16 %v243
    %v284 = vunpack.c.l.b16 %v244
    %v285 = vunpack.c.l.b16 %v245
    %v286 = vunpack.c.l.b16 %v246
    %v287 = vunpack.c.l.b16 %v247
    %v288 = vunpack.c.l.b16 %v248
    %v289 = vunpack.c.l.b16 %v249
    %v290 = vunpack.c.l.b16 %v250
    %v291 = vunpack.c.l.b16 %v251
    %v292 = vunpack.c.l.b16 %v252
    %v293 = vunpack.c.l.b16 %v253
    %v294 = vunpack.c.l.b16 %v254
    %v295 = vunpack.c.l.b16 %v255
    %v296 = vunpack.c.l.b16 %v256
    %v297 = vunpack.c.l.b16 %v257
    %v298 = vpack.c.b16 %v283, %v282
    %v299 = vpack.c.b16 %v285, %v284
    %v300 = vpack.c.b16 %v287, %v286
    %v301 = vpack.c.b16 %v289, %v288
    %v302 = vpack.c.b16 %v291, %v290
    %v303 = vpack.c.b16 %v293, %v292
    %v304 = vpack.c.b16 %v295, %v294
    %v305 = vpack.c.b16 %v297, %v296
    %314 = vmatprep.subr.bf16.mxu0 0
    %315 = vmatpush1.bf16.msra.mxu0 %v305
    %316 = vmatprep.subr.bf16.mxu0 0
    %317 = vmatpush1.bf16.msra.mxu0 %v304
    %318 = vmatprep.subr.bf16.mxu0 0
    %319 = vmatpush1.bf16.msra.mxu0 %v303
    %320 = vmatprep.subr.bf16.mxu0 0
    %321 = vmatpush1.bf16.msra.mxu0 %v302
    %322 = vmatprep.subr.bf16.mxu0 0
    %323 = vmatpush1.bf16.msra.mxu0 %v301
    %324 = vmatprep.subr.bf16.mxu0 0
    %325 = vmatpush1.bf16.msra.mxu0 %v300
    %326 = vmatprep.subr.bf16.mxu0 0
    %327 = vmatpush1.bf16.msra.mxu0 %v299
    %328 = vmatprep.subr.bf16.mxu0 0
    %329 = vmatpush1.bf16.msra.mxu0 %v298
    %330 = vmatprep.subr.bf16.mxu0 0
    %331 = vmatpush2.bf16.msra.mxu0 0
    %332 = vmatprep.subr.bf16.mxu0 0
    %333 = vmatpush2.bf16.msra.mxu0 0
    %334 = vmatprep.subr.bf16.mxu0 0
    %335 = vmatpush2.bf16.msra.mxu0 0
    %336 = vmatprep.subr.bf16.mxu0 0
    %337 = vmatpush2.bf16.msra.mxu0 0
    %338 = vmatprep.subr.bf16.mxu0 0
    %339 = vmatpush2.bf16.msra.mxu0 0
    %340 = vmatprep.subr.bf16.mxu0 0
    %341 = vmatpush2.bf16.msra.mxu0 0
    %342 = vmatprep.subr.bf16.mxu0 0
    %343 = vmatpush2.bf16.msra.mxu0 0
    %344 = vmatprep.subr.bf16.mxu0 0
    %345 = vmatpush2.bf16.msra.mxu0 0
    %346 = vmatprep.mubr.bf16.mxu0 0
    %347 = vmatmul.mubr.bf16.gmra.mxu0 %v259
    %v348 = vpop.f32.mrf.mxu0
    %v349 = vadd.f32 %v264, %v348
    %v350 = vpop.f32.mrf.mxu0
    %v351 = vpop.f32.mrf.mxu0
    %v352 = vpop.f32.mrf.mxu0
    %353 = vdwg.mxu0
    %v354 = vmul.f32 %v349, %v349
    %v355 = vmul.f32 %v354, 0.035677407
    %v356 = vadd.f32 %v355, 0.7978846
    %v357 = vmul.f32 %v349, %v356
    %v358 = vmul.f32 %v349, 0.5
    %v359 = vtanh.pop %v357
    %v360 = vadd.f32 %v359, 1.0
    %v361 = vmul.f32 %v358, %v360
    %v362 = vadd.f32 %v241, %v361
    %v363 = vld [vmem:[#allocation8] sm:$0xf]
    %v364 = vld [vmem:[#allocation8 + $0x4] sm:$0xf]
    %v365 = vld [vmem:[#allocation8 + $0x8] sm:$0xf]
    %v366 = vld [vmem:[#allocation8 + $0xc] sm:$0xf]
    %v367 = vld [vmem:[#allocation8 + $0x10] sm:$0xf]
    %v368 = vld [vmem:[#allocation8 + $0x14] sm:$0xf]
    %v369 = vld [vmem:[#allocation8 + $0x18] sm:$0xf]
    %v370 = vld [vmem:[#allocation8 + $0x1c] sm:$0xf]
    %v371 = vld [vmem:[#allocation8 + $0x20] sm:$0xf]
    %v372 = vld [vmem:[#allocation8 + $0x24] sm:$0xf]
    %v373 = vld [vmem:[#allocation8 + $0x28] sm:$0xf]
    %v374 = vld [vmem:[#allocation8 + $0x2c] sm:$0xf]
    %v375 = vld [vmem:[#allocation8 + $0x30] sm:$0xf]
    %v376 = vld [vmem:[#allocation8 + $0x34] sm:$0xf]
    %v377 = vld [vmem:[#allocation8 + $0x38] sm:$0xf]
    %v378 = vld [vmem:[#allocation8 + $0x3c] sm:$0xf]
    %v379 = vld [vmem:[%s6] sm:$0x1]
    %v380 = vpack.c.bf16 %v362, %v362
    %v382 = vlaneseq
    %v383 = vshrl.u32 %v382, 7
    %v384 = vsub.s32 0, %v383
    %v385 = vrot.slane %v379, %v384
    %v403 = vunpack.c.l.b16 %v363
    %v404 = vunpack.c.l.b16 %v364
    %v405 = vunpack.c.l.b16 %v365
    %v406 = vunpack.c.l.b16 %v366
    %v407 = vunpack.c.l.b16 %v367
    %v408 = vunpack.c.l.b16 %v368
    %v409 = vunpack.c.l.b16 %v369
    %v410 = vunpack.c.l.b16 %v370
    %v411 = vunpack.c.l.b16 %v371
    %v412 = vunpack.c.l.b16 %v372
    %v413 = vunpack.c.l.b16 %v373
    %v414 = vunpack.c.l.b16 %v374
    %v415 = vunpack.c.l.b16 %v375
    %v416 = vunpack.c.l.b16 %v376
    %v417 = vunpack.c.l.b16 %v377
    %v418 = vunpack.c.l.b16 %v378
    %v419 = vpack.c.b16 %v404, %v403
    %v420 = vpack.c.b16 %v406, %v405
    %v421 = vpack.c.b16 %v408, %v407
    %v422 = vpack.c.b16 %v410, %v409
    %v423 = vpack.c.b16 %v412, %v411
    %v424 = vpack.c.b16 %v414, %v413
    %v425 = vpack.c.b16 %v416, %v415
    %v426 = vpack.c.b16 %v418, %v417
    %435 = vmatprep.subr.bf16.mxu0 0
    %436 = vmatpush1.bf16.msra.mxu0 %v426
    %437 = vmatprep.subr.bf16.mxu0 0
    %438 = vmatpush1.bf16.msra.mxu0 %v425
    %439 = vmatprep.subr.bf16.mxu0 0
    %440 = vmatpush1.bf16.msra.mxu0 %v424
    %441 = vmatprep.subr.bf16.mxu0 0
    %442 = vmatpush1.bf16.msra.mxu0 %v423
    %443 = vmatprep.subr.bf16.mxu0 0
    %444 = vmatpush1.bf16.msra.mxu0 %v422
    %445 = vmatprep.subr.bf16.mxu0 0
    %446 = vmatpush1.bf16.msra.mxu0 %v421
    %447 = vmatprep.subr.bf16.mxu0 0
    %448 = vmatpush1.bf16.msra.mxu0 %v420
    %449 = vmatprep.subr.bf16.mxu0 0
    %450 = vmatpush1.bf16.msra.mxu0 %v419
    %451 = vmatprep.subr.bf16.mxu0 0
    %452 = vmatpush2.bf16.msra.mxu0 0
    %453 = vmatprep.subr.bf16.mxu0 0
    %454 = vmatpush2.bf16.msra.mxu0 0
    %455 = vmatprep.subr.bf16.mxu0 0
    %456 = vmatpush2.bf16.msra.mxu0 0
    %457 = vmatprep.subr.bf16.mxu0 0
    %458 = vmatpush2.bf16.msra.mxu0 0
    %459 = vmatprep.subr.bf16.mxu0 0
    %460 = vmatpush2.bf16.msra.mxu0 0
    %461 = vmatprep.subr.bf16.mxu0 0
    %462 = vmatpush2.bf16.msra.mxu0 0
    %463 = vmatprep.subr.bf16.mxu0 0
    %464 = vmatpush2.bf16.msra.mxu0 0
    %465 = vmatprep.subr.bf16.mxu0 0
    %466 = vmatpush2.bf16.msra.mxu0 0
    %467 = vmatprep.mubr.bf16.mxu0 0
    %468 = vmatmul.mubr.bf16.gmra.mxu0 %v380
    %v469 = vpop.f32.mrf.mxu0
    %v470 = vadd.f32 %v385, %v469
    %v471 = vpop.f32.mrf.mxu0
    %v472 = vpop.f32.mrf.mxu0
    %v473 = vpop.f32.mrf.mxu0
    %474 = vdwg.mxu0
    %v475 = vmul.f32 %v470, %v470
    %v476 = vmul.f32 %v475, 0.035677407
    %v477 = vadd.f32 %v476, 0.7978846
    %v478 = vmul.f32 %v470, %v477
    %v479 = vmul.f32 %v470, 0.5
    %v480 = vtanh.pop %v478
    %v481 = vadd.f32 %v480, 1.0
    %v482 = vmul.f32 %v479, %v481
    %v483 = vadd.f32 %v362, %v482
    %v484 = vld [vmem:[#allocation10] sm:$0xf]
    %v485 = vld [vmem:[#allocation10 + $0x4] sm:$0xf]
    %v486 = vld [vmem:[#allocation10 + $0x8] sm:$0xf]
    %v487 = vld [vmem:[#allocation10 + $0xc] sm:$0xf]
    %v488 = vld [vmem:[#allocation10 + $0x10] sm:$0xf]
    %v489 = vld [vmem:[#allocation10 + $0x14] sm:$0xf]
    %v490 = vld [vmem:[#allocation10 + $0x18] sm:$0xf]
    %v491 = vld [vmem:[#allocation10 + $0x1c] sm:$0xf]
    %v492 = vld [vmem:[#allocation10 + $0x20] sm:$0xf]
    %v493 = vld [vmem:[#allocation10 + $0x24] sm:$0xf]
    %v494 = vld [vmem:[#allocation10 + $0x28] sm:$0xf]
    %v495 = vld [vmem:[#allocation10 + $0x2c] sm:$0xf]
    %v496 = vld [vmem:[#allocation10 + $0x30] sm:$0xf]
    %v497 = vld [vmem:[#allocation10 + $0x34] sm:$0xf]
    %v498 = vld [vmem:[#allocation10 + $0x38] sm:$0xf]
    %v499 = vld [vmem:[#allocation10 + $0x3c] sm:$0xf]
    %v500 = vld [vmem:[%s8] sm:$0x1]
    %v501 = vpack.c.bf16 %v483, %v483
    %v503 = vlaneseq
    %v504 = vshrl.u32 %v503, 7
    %v505 = vsub.s32 0, %v504
    %v506 = vrot.slane %v500, %v505
    %v524 = vunpack.c.l.b16 %v484
    %v525 = vunpack.c.l.b16 %v485
    %v526 = vunpack.c.l.b16 %v486
    %v527 = vunpack.c.l.b16 %v487
    %v528 = vunpack.c.l.b16 %v488
    %v529 = vunpack.c.l.b16 %v489
    %v530 = vunpack.c.l.b16 %v490
    %v531 = vunpack.c.l.b16 %v491
    %v532 = vunpack.c.l.b16 %v492
    %v533 = vunpack.c.l.b16 %v493
    %v534 = vunpack.c.l.b16 %v494
    %v535 = vunpack.c.l.b16 %v495
    %v536 = vunpack.c.l.b16 %v496
    %v537 = vunpack.c.l.b16 %v497
    %v538 = vunpack.c.l.b16 %v498
    %v539 = vunpack.c.l.b16 %v499
    %v540 = vpack.c.b16 %v525, %v524
    %v541 = vpack.c.b16 %v527, %v526
    %v542 = vpack.c.b16 %v529, %v528
    %v543 = vpack.c.b16 %v531, %v530
    %v544 = vpack.c.b16 %v533, %v532
    %v545 = vpack.c.b16 %v535, %v534
    %v546 = vpack.c.b16 %v537, %v536
    %v547 = vpack.c.b16 %v539, %v538
    %556 = vmatprep.subr.bf16.mxu0 0
    %557 = vmatpush1.bf16.msra.mxu0 %v547
    %558 = vmatprep.subr.bf16.mxu0 0
    %559 = vmatpush1.bf16.msra.mxu0 %v546
    %560 = vmatprep.subr.bf16.mxu0 0
    %561 = vmatpush1.bf16.msra.mxu0 %v545
    %562 = vmatprep.subr.bf16.mxu0 0
    %563 = vmatpush1.bf16.msra.mxu0 %v544
    %564 = vmatprep.subr.bf16.mxu0 0
    %565 = vmatpush1.bf16.msra.mxu0 %v543
    %566 = vmatprep.subr.bf16.mxu0 0
    %567 = vmatpush1.bf16.msra.mxu0 %v542
    %568 = vmatprep.subr.bf16.mxu0 0
    %569 = vmatpush1.bf16.msra.mxu0 %v541
    %570 = vmatprep.subr.bf16.mxu0 0
    %571 = vmatpush1.bf16.msra.mxu0 %v540
    %572 = vmatprep.subr.bf16.mxu0 0
    %573 = vmatpush2.bf16.msra.mxu0 0
    %574 = vmatprep.subr.bf16.mxu0 0
    %575 = vmatpush2.bf16.msra.mxu0 0
    %576 = vmatprep.subr.bf16.mxu0 0
    %577 = vmatpush2.bf16.msra.mxu0 0
    %578 = vmatprep.subr.bf16.mxu0 0
    %579 = vmatpush2.bf16.msra.mxu0 0
    %580 = vmatprep.subr.bf16.mxu0 0
    %581 = vmatpush2.bf16.msra.mxu0 0
    %582 = vmatprep.subr.bf16.mxu0 0
    %583 = vmatpush2.bf16.msra.mxu0 0
    %584 = vmatprep.subr.bf16.mxu0 0
    %585 = vmatpush2.bf16.msra.mxu0 0
    %586 = vmatprep.subr.bf16.mxu0 0
    %587 = vmatpush2.bf16.msra.mxu0 0
    %588 = vmatprep.mubr.bf16.mxu0 0
    %589 = vmatmul.mubr.bf16.gmra.mxu0 %v501
    %v590 = vpop.f32.mrf.mxu0
    %v591 = vadd.f32 %v506, %v590
    %v592 = vpop.f32.mrf.mxu0
    %v593 = vpop.f32.mrf.mxu0
    %v594 = vpop.f32.mrf.mxu0
    %595 = vdwg.mxu0
    %v596 = vmul.f32 %v591, %v591
    %v597 = vmul.f32 %v596, 0.035677407
    %v598 = vadd.f32 %v597, 0.7978846
    %v599 = vmul.f32 %v591, %v598
    %v600 = vmul.f32 %v591, 0.5
    %v601 = vtanh.pop %v599
    %v602 = vadd.f32 %v601, 1.0
    %v603 = vmul.f32 %v600, %v602
    %v604 = vadd.f32 %v483, %v603
    %v605 = vld [vmem:[#allocation11] sm:$0xf]
    %v606 = vld [vmem:[#allocation11 + $0x4] sm:$0xf]
    %v607 = vld [vmem:[#allocation11 + $0x8] sm:$0xf]
    %v608 = vld [vmem:[#allocation11 + $0xc] sm:$0xf]
    %v609 = vld [vmem:[#allocation11 + $0x10] sm:$0xf]
    %v610 = vld [vmem:[#allocation11 + $0x14] sm:$0xf]
    %v611 = vld [vmem:[#allocation11 + $0x18] sm:$0xf]
    %v612 = vld [vmem:[#allocation11 + $0x1c] sm:$0xf]
    %v613 = vld [vmem:[#allocation11 + $0x20] sm:$0xf]
    %v614 = vld [vmem:[#allocation11 + $0x24] sm:$0xf]
    %v615 = vld [vmem:[#allocation11 + $0x28] sm:$0xf]
    %v616 = vld [vmem:[#allocation11 + $0x2c] sm:$0xf]
    %v617 = vld [vmem:[#allocation11 + $0x30] sm:$0xf]
    %v618 = vld [vmem:[#allocation11 + $0x34] sm:$0xf]
    %v619 = vld [vmem:[#allocation11 + $0x38] sm:$0xf]
    %v620 = vld [vmem:[#allocation11 + $0x3c] sm:$0xf]
    %v621 = vld [vmem:[%s10] sm:$0x1]
    %v622 = vpack.c.bf16 %v604, %v604
    %v624 = vlaneseq
    %v625 = vshrl.u32 %v624, 7
    %v626 = vsub.s32 0, %v625
    %v627 = vrot.slane %v621, %v626
    %v645 = vunpack.c.l.b16 %v605
    %v646 = vunpack.c.l.b16 %v606
    %v647 = vunpack.c.l.b16 %v607
    %v648 = vunpack.c.l.b16 %v608
    %v649 = vunpack.c.l.b16 %v609
    %v650 = vunpack.c.l.b16 %v610
    %v651 = vunpack.c.l.b16 %v611
    %v652 = vunpack.c.l.b16 %v612
    %v653 = vunpack.c.l.b16 %v613
    %v654 = vunpack.c.l.b16 %v614
    %v655 = vunpack.c.l.b16 %v615
    %v656 = vunpack.c.l.b16 %v616
    %v657 = vunpack.c.l.b16 %v617
    %v658 = vunpack.c.l.b16 %v618
    %v659 = vunpack.c.l.b16 %v619
    %v660 = vunpack.c.l.b16 %v620
    %v661 = vpack.c.b16 %v646, %v645
    %v662 = vpack.c.b16 %v648, %v647
    %v663 = vpack.c.b16 %v650, %v649
    %v664 = vpack.c.b16 %v652, %v651
    %v665 = vpack.c.b16 %v654, %v653
    %v666 = vpack.c.b16 %v656, %v655
    %v667 = vpack.c.b16 %v658, %v657
    %v668 = vpack.c.b16 %v660, %v659
    %677 = vmatprep.subr.bf16.mxu0 0
    %678 = vmatpush1.bf16.msra.mxu0 %v668
    %679 = vmatprep.subr.bf16.mxu0 0
    %680 = vmatpush1.bf16.msra.mxu0 %v667
    %681 = vmatprep.subr.bf16.mxu0 0
    %682 = vmatpush1.bf16.msra.mxu0 %v666
    %683 = vmatprep.subr.bf16.mxu0 0
    %684 = vmatpush1.bf16.msra.mxu0 %v665
    %685 = vmatprep.subr.bf16.mxu0 0
    %686 = vmatpush1.bf16.msra.mxu0 %v664
    %687 = vmatprep.subr.bf16.mxu0 0
    %688 = vmatpush1.bf16.msra.mxu0 %v663
    %689 = vmatprep.subr.bf16.mxu0 0
    %690 = vmatpush1.bf16.msra.mxu0 %v662
    %691 = vmatprep.subr.bf16.mxu0 0
    %692 = vmatpush1.bf16.msra.mxu0 %v661
    %693 = vmatprep.subr.bf16.mxu0 0
    %694 = vmatpush2.bf16.msra.mxu0 0
    %695 = vmatprep.subr.bf16.mxu0 0
    %696 = vmatpush2.bf16.msra.mxu0 0
    %697 = vmatprep.subr.bf16.mxu0 0
    %698 = vmatpush2.bf16.msra.mxu0 0
    %699 = vmatprep.subr.bf16.mxu0 0
    %700 = vmatpush2.bf16.msra.mxu0 0
    %701 = vmatprep.subr.bf16.mxu0 0
    %702 = vmatpush2.bf16.msra.mxu0 0
    %703 = vmatprep.subr.bf16.mxu0 0
    %704 = vmatpush2.bf16.msra.mxu0 0
    %705 = vmatprep.subr.bf16.mxu0 0
    %706 = vmatpush2.bf16.msra.mxu0 0
    %707 = vmatprep.subr.bf16.mxu0 0
    %708 = vmatpush2.bf16.msra.mxu0 0
    %709 = vmatprep.mubr.bf16.mxu0 0
    %710 = vmatmul.mubr.bf16.gmra.mxu0 %v622
    %v711 = vpop.f32.mrf.mxu0
    %v712 = vadd.f32 %v627, %v711
    %v713 = vpop.f32.mrf.mxu0
    %v714 = vpop.f32.mrf.mxu0
    %v715 = vpop.f32.mrf.mxu0
    %716 = vdwg.mxu0
    %v717 = vmul.f32 %v712, %v712
    %v718 = vmul.f32 %v717, 0.035677407
    %v719 = vadd.f32 %v718, 0.7978846
    %v720 = vmul.f32 %v712, %v719
    %v721 = vmul.f32 %v712, 0.5
    %v722 = vtanh.pop %v720
    %v723 = vadd.f32 %v722, 1.0
    %v724 = vmul.f32 %v721, %v723
    %725 = vst [vmem:[#allocation13] sm:$0xff] %v724
    // Predicated region
    $region70: #{tpu_custom_call.1} parent=1 // pred_check
      _
    $region71: #{tpu_custom_call.1} parent=1 // pred_check_branch
      %727 = sbr.rel (0) target = $region73
    $region72: #{tpu_custom_call.1} parent=1 // pred_region
      %s729 = ssub.s32 128, 128
      %730 = vsyncadd [#allocation4], %s729
      %s732 = sshll.u32 [#allocation13], 4
      %s733 = int_to_ptr.vmem [resolvable:$true] %s732
      %735 = dma.vmem_to_hbm [thread:$0]  %s733, 128, %s11, [#allocation4]
    $region73: #{tpu_custom_call.1} parent=1 // pred_fallthru
      _
    // Predicated region
    $region74: #{tpu_custom_call.1} parent=1 // pred_check
      _
    $region75: #{tpu_custom_call.1} parent=1 // pred_check_branch
      %737 = sbr.rel (0) target = $region77
    $region76: #{tpu_custom_call.1} parent=1 // pred_region
      %738 = dma.done [#allocation4], 128
    $region77: #{tpu_custom_call.1} parent=1 // pred_fallthru
      _
    %739 = vsyncpa [#allocation3], 1
    %740 = vsyncpa [#allocation6], 1
    %741 = vsyncpa [#allocation9], 1
    %742 = vsyncpa [#allocation12], 1
    %743 = vsyncpa [#allocation4], 1

</llo_original>
